<compile_context>
chip_gen: v5e
topology: v5e:2x2
jax: 0.10.0
libtpu: 0.0.40
codegen_flags: <defaults>
</compile_context>

<pallas_src>
import functools

import jax
import jax.numpy as jnp
from jax import lax
from jax.experimental import pallas as pl
from jax.experimental.pallas import tpu as pltpu


def _round_up(x, m):
    return (x + m - 1) // m * m


def _svdpp_kernel(emb_dim, max_len,
                  gm_ref, sids_ref, pids_ref, lens_ref, imp_ref,
                  pb_ref, qb_ref, y_ref,
                  out_ref):
    """One batch tile: out[b] = mu + b_s + b_p + q_p . (p_s + y_norm)."""
    sids = sids_ref[...]            # [TB, 1] int32
    pids = pids_ref[...]            # [TB, 1] int32
    lens = lens_ref[...]            # [TB, 1] int32
    imp = imp_ref[...]              # [TB, L] int32

    tb = sids.shape[0]
    ns = pb_ref.shape[0]
    np_ = qb_ref.shape[0]
    d = emb_dim

    # ---- explicit gathers (embedding + fused bias column), f32 MXU ----------
    s_iota = lax.broadcasted_iota(jnp.int32, (tb, ns), 1)
    p_iota = lax.broadcasted_iota(jnp.int32, (tb, np_), 1)
    oh_s = (s_iota == sids).astype(jnp.float32)                          # [TB, NS]
    oh_p = (p_iota == pids).astype(jnp.float32)                          # [TB, NP]
    psb = jnp.dot(oh_s, pb_ref[...], preferred_element_type=jnp.float32)  # [TB, D+1]
    qpb = jnp.dot(oh_p, qb_ref[...], preferred_element_type=jnp.float32)  # [TB, D+1]
    p_s = psb[:, :d]                                                     # [TB, D]
    b_s = psb[:, d:d + 1]                                                # [TB, 1]

    # ---- implicit feedback: one count matrix, one MXU matmul ----------------
    # counts[b, j] = #{ l < lens[b] : imp[b, l] == j }  (duplicates counted,
    # exactly matching the reference per-slot sum).  Counts are accumulated in
    # f32 (native VPU adds on all generations, exact for counts <= L) and cast
    # to bf16 once before the matmul.
    l_iota = lax.broadcasted_iota(jnp.int32, (tb, max_len), 1)

    def count_body(l, cnt):
        # Extract column l of imp for a traced l via a masked 8-lane reduce
        # (avoids a dynamic slice on the lane dimension).
        idx_l = jnp.sum(jnp.where(l_iota == l, imp, 0),
                        axis=1, keepdims=True)                           # [TB, 1]
        sel = (p_iota == idx_l) & (lens > l)                             # [TB, NP]
        return cnt + sel.astype(jnp.float32)

    counts = lax.fori_loop(0, max_len, count_body,
                           jnp.zeros((tb, np_), jnp.float32),
                           unroll=True)                                  # [TB, NP]
    y_sum = jnp.dot(counts.astype(jnp.bfloat16), y_ref[...],
                    preferred_element_type=jnp.float32)                  # [TB, D]

    # 1/(sqrt(len)+1e-9) kept exact (pl.reciprocal(approx=True) would break the
    # 1e-5 match with the module).
    inv_norm = 1.0 / (jnp.sqrt(lens.astype(jnp.float32)) + 1e-9)         # [TB, 1]
    y_norm = y_sum * inv_norm

    # ---- fold b_p into the cross-lane reduce (ones-column trick) ------------
    lhs = jnp.concatenate([p_s + y_norm,
                           jnp.ones((tb, 1), jnp.float32)], axis=1)      # [TB, D+1]
    inter_plus_bp = jnp.sum(qpb * lhs, axis=1, keepdims=True)            # [TB, 1]

    # Output is only TB*4 bytes/step; the lane-dense [1, TB] store layout is
    # intentionally not applied (epilogue is invisible at this size).
    out_ref[...] = gm_ref[0, 0] + b_s + inter_plus_bp


def prepare_svdpp_tables(P, Q, Y, Bs, Bp):
    """Fuse bias columns into the embedding tables and cast Y once.

    Hoisted out of the per-forward path: call this once when parameters are
    created/updated, not on every forward.
    """
    NS, _ = P.shape
    NP = Q.shape[0]
    PB = jnp.concatenate([P.astype(jnp.float32),
                          jnp.reshape(Bs, (NS, 1)).astype(jnp.float32)], axis=1)
    QB = jnp.concatenate([Q.astype(jnp.float32),
                          jnp.reshape(Bp, (NP, 1)).astype(jnp.float32)], axis=1)
    Ybf = Y.astype(jnp.bfloat16)   # implicit path runs on the bf16 MXU
    return PB, QB, Ybf


def _auto_batch_tile(batch):
    """Generation-aware batch tile: 256 on v6e/v7x (256-wide MXU), 128 on
    older chips; keep the grid at >=2 steps where possible (v7x dual TC)."""
    try:
        kind = jax.devices()[0].device_kind.lower()
    except Exception:
        kind = ""
    base = 128 if any(v in kind for v in ("v2", "v3", "v4", "v5")) else 256
    tb = min(base, _round_up(max(batch, 1), 16))
    while tb > 16 and pl.cdiv(batch, tb) < 2:
        tb //= 2
    return max(16, tb)


def svdpp_forward(sids, pids, implicit_pids, implicit_lengths,
                  tables, global_mean, *, batch_tile=None):
    """tables = prepare_svdpp_tables(P, Q, Y, Bs, Bp)."""
    PB, QB, Ybf = tables
    B = sids.shape[0]
    L = implicit_pids.shape[1]
    NS = PB.shape[0]
    NP = QB.shape[0]
    D = PB.shape[1] - 1

    if batch_tile is None:
        TB = _auto_batch_tile(B)
    else:
        TB = _round_up(max(int(batch_tile), 8), 8)
    b_pad = _round_up(B, TB)
    grid = (b_pad // TB,)

    def pad_rows(x):
        return jnp.pad(x, ((0, b_pad - x.shape[0]), (0, 0)))

    sids2 = pad_rows(sids.reshape(B, 1).astype(jnp.int32))
    pids2 = pad_rows(pids.reshape(B, 1).astype(jnp.int32))
    lens2 = pad_rows(implicit_lengths.reshape(B, 1).astype(jnp.int32))
    imp2 = pad_rows(implicit_pids.reshape(B, L).astype(jnp.int32))
    gm = jnp.full((1, 1), global_mean, jnp.float32)   # SMEM scalar (no recompile)

    try:
        vmem_cap = int(pltpu.get_tpu_info().vmem_capacity_bytes)
    except Exception:
        vmem_cap = 64 * 2**20        # conservative (v7x per-TC)

    table_bytes_raw = PB.size * 4 + QB.size * 4 + Ybf.size * 2
    kernel = functools.partial(_svdpp_kernel, D, L)

    def build(single_buffer_tables):
        tbl_kw = ({"pipeline_mode": pl.Buffered(1)} if single_buffer_tables else {})
        table_bytes = table_bytes_raw * (1 if single_buffer_tables else 2)
        # one-hots / count matrix / small f32 temps (compiler scratch, single copy)
        work_bytes = TB * (3 * NP + NS + 8 * (D + 1)) * 4
        io_bytes = 2 * TB * (L + 4) * 4          # double-buffered row-tile I/O
        need = table_bytes + work_bytes + io_bytes + 4 * 2**20
        vmem_limit = int(min(max(need, 16 * 2**20), int(0.72 * vmem_cap)))

        row_spec = pl.BlockSpec((TB, 1), lambda g: (g, 0))
        return pl.pallas_call(
            kernel,
            out_shape=jax.ShapeDtypeStruct((b_pad, 1), jnp.float32),
            grid=grid,
            in_specs=[
                pl.BlockSpec(memory_space=pltpu.MemorySpace.SMEM),          # global mean
                row_spec,                                                   # SIDs
                row_spec,                                                   # PIDs
                row_spec,                                                   # implicit lengths
                pl.BlockSpec((TB, L), lambda g: (g, 0)),                    # implicit PIDs
                pl.BlockSpec((NS, D + 1), lambda g: (0, 0), **tbl_kw),      # [P | Bs] resident
                pl.BlockSpec((NP, D + 1), lambda g: (0, 0), **tbl_kw),      # [Q | Bp] resident
                pl.BlockSpec((NP, D), lambda g: (0, 0), **tbl_kw),          # Y (bf16) resident
            ],
            out_specs=pl.BlockSpec((TB, 1), lambda g: (g, 0)),
            compiler_params=pltpu.CompilerParams(
                dimension_semantics=("parallel",),
                vmem_limit_bytes=vmem_limit),
        )

    args = (gm, sids2, pids2, lens2, imp2, PB, QB, Ybf)
    try:
        out = build(True)(*args)
    except Exception:
        # pipeline_mode=pl.Buffered(1) unsupported on this JAX version/backend:
        # fall back to default (double-buffered) resident-table specs.
        out = build(False)(*args)
    return out[:B, 0]


def svdpp_reference(sids, pids, implicit_pids, implicit_lengths,
                    P, Q, Y, Bs, Bp, global_mean):
    """Pure-JAX reference matching the PyTorch forward semantics."""
    p_s = P[sids]
    q_p = Q[pids]
    b_s = Bs[sids][:, 0]
    b_p = Bp[pids][:, 0]
    y_j = Y[implicit_pids]                                           # [B, L, D]
    L = implicit_pids.shape[1]
    mask = (jnp.arange(L)[None, :] < implicit_lengths[:, None]).astype(jnp.float32)
    y_sum = (y_j * mask[:, :, None]).sum(axis=1)
    norm = 1.0 / (jnp.sqrt(implicit_lengths.astype(jnp.float32)) + 1e-9)
    y_norm = y_sum * norm[:, None]
    interaction = jnp.sum(q_p * (p_s + y_norm), axis=1)
    return global_mean + b_s + b_p + interaction


if __name__ == "__main__":
    # Small, forward-consistent shapes.
    num_scientists = 64
    num_papers = 128
    embedding_dim = 32
    batch = 19                     # deliberately not a multiple of the tile
    max_implicit_len = 8
    global_mean = 3.5

    key = jax.random.PRNGKey(0)
    kP, kQ, kY, kBs, kBp, kS, kPid, kImp, kLen = jax.random.split(key, 9)

    P = 0.01 * jax.random.normal(kP, (num_scientists, embedding_dim), jnp.float32)
    Q = 0.01 * jax.random.normal(kQ, (num_papers, embedding_dim), jnp.float32)
    Y = 0.01 * jax.random.normal(kY, (num_papers, embedding_dim), jnp.float32)
    # The module zero-inits the biases; small nonzero biases are used here so
    # the fused-bias / ones-column reduce path is actually exercised.
    Bs = 0.01 * jax.random.normal(kBs, (num_scientists, 1), jnp.float32)
    Bp = 0.01 * jax.random.normal(kBp, (num_papers, 1), jnp.float32)

    SIDs = jax.random.randint(kS, (batch,), 0, num_scientists, jnp.int32)
    PIDs = jax.random.randint(kPid, (batch,), 0, num_papers, jnp.int32)
    implicit_PIDs = jax.random.randint(kImp, (batch, max_implicit_len), 0,
                                       num_papers, jnp.int32)
    implicit_lengths = jax.random.randint(kLen, (batch,), 1,
                                          max_implicit_len + 1, jnp.int32)

    tables = prepare_svdpp_tables(P, Q, Y, Bs, Bp)   # built once, reused
    ref = svdpp_reference(SIDs, PIDs, implicit_PIDs, implicit_lengths,
                          P, Q, Y, Bs, Bp, global_mean)

    # Tiny explicit tile: exercises the multi-step "parallel" grid and padding.
    pred = svdpp_forward(SIDs, PIDs, implicit_PIDs, implicit_lengths,
                         tables, global_mean, batch_tile=8)
    pred = jax.block_until_ready(pred)
    assert pred.shape == (batch,)
    # Y is fed to the MXU in bf16 (f32 accumulation); tolerance covers the
    # resulting rounding of the implicit-feedback term.
    assert jnp.allclose(pred, ref, rtol=1e-5, atol=5e-5), (pred, ref)

    # Auto (generation-aware) tile path.
    pred_auto = svdpp_forward(SIDs, PIDs, implicit_PIDs, implicit_lengths,
                              tables, global_mean)
    pred_auto = jax.block_until_ready(pred_auto)
    assert jnp.allclose(pred_auto, ref, rtol=1e-5, atol=5e-5), (pred_auto, ref)

    print("KERNEL_OK")
</pallas_src>

<mosaic_0001>
module attributes {stable_mosaic.version = 11 : i64} {
  func.func @_svdpp_kernel(%arg0: i32, %arg1: memref<1x1xf32, #tpu.memory_space<smem>>, %arg2: memref<8x1xi32, #tpu.memory_space<vmem>>, %arg3: memref<8x1xi32, #tpu.memory_space<vmem>>, %arg4: memref<8x1xi32, #tpu.memory_space<vmem>>, %arg5: memref<8x8xi32, #tpu.memory_space<vmem>>, %arg6: memref<64x33xf32, #tpu.memory_space<vmem>>, %arg7: memref<128x33xf32, #tpu.memory_space<vmem>>, %arg8: memref<128x32xbf16, #tpu.memory_space<vmem>>, %arg9: memref<8x1xf32, #tpu.memory_space<vmem>>) attributes {dimension_semantics = [#tpu.dimension_semantics<parallel>], iteration_bounds = array<i64: 3>, scalar_prefetch = 0 : i64, scratch_operands = 0 : i64, tpu.core_type = #tpu.core_type<tc>, window_params = [{transform_indices = @transform_0, window_bounds = array<i64: 1, 1>}, {transform_indices = @transform_1, window_bounds = array<i64: 8, 1>}, {transform_indices = @transform_2, window_bounds = array<i64: 8, 1>}, {transform_indices = @transform_3, window_bounds = array<i64: 8, 1>}, {transform_indices = @transform_4, window_bounds = array<i64: 8, 8>}, {pipeline_mode = #tpu.pipeline_mode<synchronous>, transform_indices = @transform_5, window_bounds = array<i64: 64, 33>}, {pipeline_mode = #tpu.pipeline_mode<synchronous>, transform_indices = @transform_6, window_bounds = array<i64: 128, 33>}, {pipeline_mode = #tpu.pipeline_mode<synchronous>, transform_indices = @transform_7, window_bounds = array<i64: 128, 32>}, {transform_indices = @transform_8, window_bounds = array<i64: 8, 1>}]} {
    %c0 = arith.constant 0 : index
    %c0_0 = arith.constant 0 : index
    %0 = vector.load %arg2[%c0, %c0_0] : memref<8x1xi32, #tpu.memory_space<vmem>>, vector<8x1xi32>
    %c0_1 = arith.constant 0 : index
    %c0_2 = arith.constant 0 : index
    %1 = vector.load %arg3[%c0_1, %c0_2] : memref<8x1xi32, #tpu.memory_space<vmem>>, vector<8x1xi32>
    %c0_3 = arith.constant 0 : index
    %c0_4 = arith.constant 0 : index
    %2 = vector.load %arg4[%c0_3, %c0_4] : memref<8x1xi32, #tpu.memory_space<vmem>>, vector<8x1xi32>
    %c0_5 = arith.constant 0 : index
    %c0_6 = arith.constant 0 : index
    %3 = vector.load %arg5[%c0_5, %c0_6] : memref<8x8xi32, #tpu.memory_space<vmem>>, vector<8x8xi32>
    %4 = tpu.iota {dimensions = array<i32: 1>} : vector<8x64xi32>
    %5 = tpu.iota {dimensions = array<i32: 1>} : vector<8x128xi32>
    %6 = vector.broadcast %0 : vector<8x1xi32> to vector<8x64xi32>
    %7 = arith.cmpi eq, %4, %6 : vector<8x64xi32>
    %8 = arith.extui %7 : vector<8x64xi1> to vector<8x64xi32>
    %9 = arith.sitofp %8 : vector<8x64xi32> to vector<8x64xf32>
    %10 = vector.broadcast %1 : vector<8x1xi32> to vector<8x128xi32>
    %11 = arith.cmpi eq, %5, %10 : vector<8x128xi32>
    %12 = arith.extui %11 : vector<8x128xi1> to vector<8x128xi32>
    %13 = arith.sitofp %12 : vector<8x128xi32> to vector<8x128xf32>
    %c0_7 = arith.constant 0 : index
    %c0_8 = arith.constant 0 : index
    %14 = vector.load %arg6[%c0_7, %c0_8] : memref<64x33xf32, #tpu.memory_space<vmem>>, vector<64x33xf32>
    %cst = arith.constant dense<0.000000e+00> : vector<8x33xf32>
    %15 = tpu.matmul %9, %14, %cst {dimension_numbers = #tpu.dot_dimension_numbers<[1], [0], [0], [1], [0, 0, 1, 1], [], []>} : vector<8x64xf32>, vector<64x33xf32>, vector<8x33xf32> -> vector<8x33xf32>
    %c0_9 = arith.constant 0 : index
    %c0_10 = arith.constant 0 : index
    %16 = vector.load %arg7[%c0_9, %c0_10] : memref<128x33xf32, #tpu.memory_space<vmem>>, vector<128x33xf32>
    %cst_11 = arith.constant dense<0.000000e+00> : vector<8x33xf32>
    %17 = tpu.matmul %13, %16, %cst_11 {dimension_numbers = #tpu.dot_dimension_numbers<[1], [0], [0], [1], [0, 0, 1, 1], [], []>} : vector<8x128xf32>, vector<128x33xf32>, vector<8x33xf32> -> vector<8x33xf32>
    %18 = vector.extract_strided_slice %15 {offsets = [0, 0], sizes = [8, 32], strides = [1, 1]} : vector<8x33xf32> to vector<8x32xf32>
    %19 = vector.extract_strided_slice %15 {offsets = [0, 32], sizes = [8, 1], strides = [1, 1]} : vector<8x33xf32> to vector<8x1xf32>
    %20 = tpu.iota {dimensions = array<i32: 1>} : vector<8x8xi32>
    %cst_12 = arith.constant 0.000000e+00 : f32
    %21 = vector.broadcast %cst_12 : f32 to vector<8x128xf32>
    %c0_i32 = arith.constant 0 : i32
    %22 = vector.broadcast %c0_i32 : i32 to vector<8x8xi32>
    %23 = arith.cmpi eq, %20, %22 : vector<8x8xi32>
    %c0_i32_13 = arith.constant 0 : i32
    %24 = vector.broadcast %c0_i32_13 : i32 to vector<8x8xi32>
    %25 = arith.select %23, %3, %24 : vector<8x8xi1>, vector<8x8xi32>
    %cst_14 = arith.constant dense<0> : vector<8xi32>
    %26 = vector.multi_reduction <add>, %25, %cst_14 [1] : vector<8x8xi32> to vector<8xi32>
    %27 = vector.shape_cast %26 : vector<8xi32> to vector<8x1xi32>
    %28 = vector.broadcast %27 : vector<8x1xi32> to vector<8x128xi32>
    %29 = arith.cmpi eq, %5, %28 : vector<8x128xi32>
    %30 = vector.broadcast %c0_i32 : i32 to vector<8x1xi32>
    %31 = arith.cmpi sgt, %2, %30 : vector<8x1xi32>
    %32 = vector.broadcast %31 : vector<8x1xi1> to vector<8x128xi1>
    %33 = arith.andi %29, %32 : vector<8x128xi1>
    %34 = arith.extui %33 : vector<8x128xi1> to vector<8x128xi32>
    %35 = arith.sitofp %34 : vector<8x128xi32> to vector<8x128xf32>
    %36 = arith.addf %21, %35 : vector<8x128xf32>
    %c1_i32 = arith.constant 1 : i32
    %37 = vector.broadcast %c1_i32 : i32 to vector<8x8xi32>
    %38 = arith.cmpi eq, %20, %37 : vector<8x8xi32>
    %c0_i32_15 = arith.constant 0 : i32
    %39 = vector.broadcast %c0_i32_15 : i32 to vector<8x8xi32>
    %40 = arith.select %38, %3, %39 : vector<8x8xi1>, vector<8x8xi32>
    %cst_16 = arith.constant dense<0> : vector<8xi32>
    %41 = vector.multi_reduction <add>, %40, %cst_16 [1] : vector<8x8xi32> to vector<8xi32>
    %42 = vector.shape_cast %41 : vector<8xi32> to vector<8x1xi32>
    %43 = vector.broadcast %42 : vector<8x1xi32> to vector<8x128xi32>
    %44 = arith.cmpi eq, %5, %43 : vector<8x128xi32>
    %45 = vector.broadcast %c1_i32 : i32 to vector<8x1xi32>
    %46 = arith.cmpi sgt, %2, %45 : vector<8x1xi32>
    %47 = vector.broadcast %46 : vector<8x1xi1> to vector<8x128xi1>
    %48 = arith.andi %44, %47 : vector<8x128xi1>
    %49 = arith.extui %48 : vector<8x128xi1> to vector<8x128xi32>
    %50 = arith.sitofp %49 : vector<8x128xi32> to vector<8x128xf32>
    %51 = arith.addf %36, %50 : vector<8x128xf32>
    %c2_i32 = arith.constant 2 : i32
    %52 = vector.broadcast %c2_i32 : i32 to vector<8x8xi32>
    %53 = arith.cmpi eq, %20, %52 : vector<8x8xi32>
    %c0_i32_17 = arith.constant 0 : i32
    %54 = vector.broadcast %c0_i32_17 : i32 to vector<8x8xi32>
    %55 = arith.select %53, %3, %54 : vector<8x8xi1>, vector<8x8xi32>
    %cst_18 = arith.constant dense<0> : vector<8xi32>
    %56 = vector.multi_reduction <add>, %55, %cst_18 [1] : vector<8x8xi32> to vector<8xi32>
    %57 = vector.shape_cast %56 : vector<8xi32> to vector<8x1xi32>
    %58 = vector.broadcast %57 : vector<8x1xi32> to vector<8x128xi32>
    %59 = arith.cmpi eq, %5, %58 : vector<8x128xi32>
    %60 = vector.broadcast %c2_i32 : i32 to vector<8x1xi32>
    %61 = arith.cmpi sgt, %2, %60 : vector<8x1xi32>
    %62 = vector.broadcast %61 : vector<8x1xi1> to vector<8x128xi1>
    %63 = arith.andi %59, %62 : vector<8x128xi1>
    %64 = arith.extui %63 : vector<8x128xi1> to vector<8x128xi32>
    %65 = arith.sitofp %64 : vector<8x128xi32> to vector<8x128xf32>
    %66 = arith.addf %51, %65 : vector<8x128xf32>
    %c3_i32 = arith.constant 3 : i32
    %67 = vector.broadcast %c3_i32 : i32 to vector<8x8xi32>
    %68 = arith.cmpi eq, %20, %67 : vector<8x8xi32>
    %c0_i32_19 = arith.constant 0 : i32
    %69 = vector.broadcast %c0_i32_19 : i32 to vector<8x8xi32>
    %70 = arith.select %68, %3, %69 : vector<8x8xi1>, vector<8x8xi32>
    %cst_20 = arith.constant dense<0> : vector<8xi32>
    %71 = vector.multi_reduction <add>, %70, %cst_20 [1] : vector<8x8xi32> to vector<8xi32>
    %72 = vector.shape_cast %71 : vector<8xi32> to vector<8x1xi32>
    %73 = vector.broadcast %72 : vector<8x1xi32> to vector<8x128xi32>
    %74 = arith.cmpi eq, %5, %73 : vector<8x128xi32>
    %75 = vector.broadcast %c3_i32 : i32 to vector<8x1xi32>
    %76 = arith.cmpi sgt, %2, %75 : vector<8x1xi32>
    %77 = vector.broadcast %76 : vector<8x1xi1> to vector<8x128xi1>
    %78 = arith.andi %74, %77 : vector<8x128xi1>
    %79 = arith.extui %78 : vector<8x128xi1> to vector<8x128xi32>
    %80 = arith.sitofp %79 : vector<8x128xi32> to vector<8x128xf32>
    %81 = arith.addf %66, %80 : vector<8x128xf32>
    %c4_i32 = arith.constant 4 : i32
    %82 = vector.broadcast %c4_i32 : i32 to vector<8x8xi32>
    %83 = arith.cmpi eq, %20, %82 : vector<8x8xi32>
    %c0_i32_21 = arith.constant 0 : i32
    %84 = vector.broadcast %c0_i32_21 : i32 to vector<8x8xi32>
    %85 = arith.select %83, %3, %84 : vector<8x8xi1>, vector<8x8xi32>
    %cst_22 = arith.constant dense<0> : vector<8xi32>
    %86 = vector.multi_reduction <add>, %85, %cst_22 [1] : vector<8x8xi32> to vector<8xi32>
    %87 = vector.shape_cast %86 : vector<8xi32> to vector<8x1xi32>
    %88 = vector.broadcast %87 : vector<8x1xi32> to vector<8x128xi32>
    %89 = arith.cmpi eq, %5, %88 : vector<8x128xi32>
    %90 = vector.broadcast %c4_i32 : i32 to vector<8x1xi32>
    %91 = arith.cmpi sgt, %2, %90 : vector<8x1xi32>
    %92 = vector.broadcast %91 : vector<8x1xi1> to vector<8x128xi1>
    %93 = arith.andi %89, %92 : vector<8x128xi1>
    %94 = arith.extui %93 : vector<8x128xi1> to vector<8x128xi32>
    %95 = arith.sitofp %94 : vector<8x128xi32> to vector<8x128xf32>
    %96 = arith.addf %81, %95 : vector<8x128xf32>
    %c5_i32 = arith.constant 5 : i32
    %97 = vector.broadcast %c5_i32 : i32 to vector<8x8xi32>
    %98 = arith.cmpi eq, %20, %97 : vector<8x8xi32>
    %c0_i32_23 = arith.constant 0 : i32
    %99 = vector.broadcast %c0_i32_23 : i32 to vector<8x8xi32>
    %100 = arith.select %98, %3, %99 : vector<8x8xi1>, vector<8x8xi32>
    %cst_24 = arith.constant dense<0> : vector<8xi32>
    %101 = vector.multi_reduction <add>, %100, %cst_24 [1] : vector<8x8xi32> to vector<8xi32>
    %102 = vector.shape_cast %101 : vector<8xi32> to vector<8x1xi32>
    %103 = vector.broadcast %102 : vector<8x1xi32> to vector<8x128xi32>
    %104 = arith.cmpi eq, %5, %103 : vector<8x128xi32>
    %105 = vector.broadcast %c5_i32 : i32 to vector<8x1xi32>
    %106 = arith.cmpi sgt, %2, %105 : vector<8x1xi32>
    %107 = vector.broadcast %106 : vector<8x1xi1> to vector<8x128xi1>
    %108 = arith.andi %104, %107 : vector<8x128xi1>
    %109 = arith.extui %108 : vector<8x128xi1> to vector<8x128xi32>
    %110 = arith.sitofp %109 : vector<8x128xi32> to vector<8x128xf32>
    %111 = arith.addf %96, %110 : vector<8x128xf32>
    %c6_i32 = arith.constant 6 : i32
    %112 = vector.broadcast %c6_i32 : i32 to vector<8x8xi32>
    %113 = arith.cmpi eq, %20, %112 : vector<8x8xi32>
    %c0_i32_25 = arith.constant 0 : i32
    %114 = vector.broadcast %c0_i32_25 : i32 to vector<8x8xi32>
    %115 = arith.select %113, %3, %114 : vector<8x8xi1>, vector<8x8xi32>
    %cst_26 = arith.constant dense<0> : vector<8xi32>
    %116 = vector.multi_reduction <add>, %115, %cst_26 [1] : vector<8x8xi32> to vector<8xi32>
    %117 = vector.shape_cast %116 : vector<8xi32> to vector<8x1xi32>
    %118 = vector.broadcast %117 : vector<8x1xi32> to vector<8x128xi32>
    %119 = arith.cmpi eq, %5, %118 : vector<8x128xi32>
    %120 = vector.broadcast %c6_i32 : i32 to vector<8x1xi32>
    %121 = arith.cmpi sgt, %2, %120 : vector<8x1xi32>
    %122 = vector.broadcast %121 : vector<8x1xi1> to vector<8x128xi1>
    %123 = arith.andi %119, %122 : vector<8x128xi1>
    %124 = arith.extui %123 : vector<8x128xi1> to vector<8x128xi32>
    %125 = arith.sitofp %124 : vector<8x128xi32> to vector<8x128xf32>
    %126 = arith.addf %111, %125 : vector<8x128xf32>
    %c7_i32 = arith.constant 7 : i32
    %127 = vector.broadcast %c7_i32 : i32 to vector<8x8xi32>
    %128 = arith.cmpi eq, %20, %127 : vector<8x8xi32>
    %c0_i32_27 = arith.constant 0 : i32
    %129 = vector.broadcast %c0_i32_27 : i32 to vector<8x8xi32>
    %130 = arith.select %128, %3, %129 : vector<8x8xi1>, vector<8x8xi32>
    %cst_28 = arith.constant dense<0> : vector<8xi32>
    %131 = vector.multi_reduction <add>, %130, %cst_28 [1] : vector<8x8xi32> to vector<8xi32>
    %132 = vector.shape_cast %131 : vector<8xi32> to vector<8x1xi32>
    %133 = vector.broadcast %132 : vector<8x1xi32> to vector<8x128xi32>
    %134 = arith.cmpi eq, %5, %133 : vector<8x128xi32>
    %135 = vector.broadcast %c7_i32 : i32 to vector<8x1xi32>
    %136 = arith.cmpi sgt, %2, %135 : vector<8x1xi32>
    %137 = vector.broadcast %136 : vector<8x1xi1> to vector<8x128xi1>
    %138 = arith.andi %134, %137 : vector<8x128xi1>
    %139 = arith.extui %138 : vector<8x128xi1> to vector<8x128xi32>
    %140 = arith.sitofp %139 : vector<8x128xi32> to vector<8x128xf32>
    %141 = arith.addf %126, %140 : vector<8x128xf32>
    %c8_i32 = arith.constant 8 : i32
    %142 = arith.truncf %141 : vector<8x128xf32> to vector<8x128xbf16>
    %c0_29 = arith.constant 0 : index
    %c0_30 = arith.constant 0 : index
    %143 = vector.load %arg8[%c0_29, %c0_30] : memref<128x32xbf16, #tpu.memory_space<vmem>>, vector<128x32xbf16>
    %cst_31 = arith.constant dense<0.000000e+00> : vector<8x32xf32>
    %144 = tpu.matmul %142, %143, %cst_31 {dimension_numbers = #tpu.dot_dimension_numbers<[1], [0], [0], [1], [0, 0, 1, 1], [], []>} : vector<8x128xbf16>, vector<128x32xbf16>, vector<8x32xf32> -> vector<8x32xf32>
    %145 = arith.sitofp %2 : vector<8x1xi32> to vector<8x1xf32>
    %146 = math.sqrt %145 : vector<8x1xf32>
    %cst_32 = arith.constant 9.99999971E-10 : f32
    %147 = vector.broadcast %cst_32 : f32 to vector<8x1xf32>
    %148 = arith.addf %146, %147 : vector<8x1xf32>
    %cst_33 = arith.constant 1.000000e+00 : f32
    %149 = vector.broadcast %cst_33 : f32 to vector<8x1xf32>
    %150 = arith.divf %149, %148 : vector<8x1xf32>
    %151 = vector.broadcast %150 : vector<8x1xf32> to vector<8x32xf32>
    %152 = arith.mulf %144, %151 : vector<8x32xf32>
    %153 = arith.addf %18, %152 : vector<8x32xf32>
    %cst_34 = arith.constant 1.000000e+00 : f32
    %154 = vector.broadcast %cst_34 : f32 to vector<8x1xf32>
    %155 = tpu.concatenate %153, %154 in 1 : vector<8x32xf32>, vector<8x1xf32> -> vector<8x33xf32>
    %156 = arith.mulf %17, %155 : vector<8x33xf32>
    %cst_35 = arith.constant dense<0.000000e+00> : vector<8xf32>
    %157 = vector.multi_reduction <add>, %156, %cst_35 [1] : vector<8x33xf32> to vector<8xf32>
    %158 = vector.shape_cast %157 : vector<8xf32> to vector<8x1xf32>
    %c0_36 = arith.constant 0 : index
    %c0_37 = arith.constant 0 : index
    %159 = memref.load %arg1[%c0_36, %c0_37] : memref<1x1xf32, #tpu.memory_space<smem>>
    %160 = vector.broadcast %159 : f32 to vector<8x1xf32>
    %161 = arith.addf %160, %19 : vector<8x1xf32>
    %162 = arith.addf %161, %158 : vector<8x1xf32>
    %c0_38 = arith.constant 0 : index
    %c0_39 = arith.constant 0 : index
    %163 = vector.load %arg9[%c0_38, %c0_39] : memref<8x1xf32, #tpu.memory_space<vmem>>, vector<8x1xf32>
    tpu.vector_store %arg9[%c0_38, %c0_39], %162 {strides = array<i32>} : memref<8x1xf32, #tpu.memory_space<vmem>>, vector<8x1xf32>,
    return
  }
  func.func @transform_0(%arg0: i32) -> (i32, i32) {
    %c0_i32 = arith.constant 0 : i32
    %c0_i32_0 = arith.constant 0 : i32
    %c0_i32_1 = arith.constant 0 : i32
    return %c0_i32, %c0_i32_0 : i32, i32
  }
  func.func @transform_1(%arg0: i32) -> (i32, i32) {
    %c0_i32 = arith.constant 0 : i32
    %c0_i32_0 = arith.constant 0 : i32
    return %arg0, %c0_i32 : i32, i32
  }
  func.func @transform_2(%arg0: i32) -> (i32, i32) {
    %c0_i32 = arith.constant 0 : i32
    %c0_i32_0 = arith.constant 0 : i32
    return %arg0, %c0_i32 : i32, i32
  }
  func.func @transform_3(%arg0: i32) -> (i32, i32) {
    %c0_i32 = arith.constant 0 : i32
    %c0_i32_0 = arith.constant 0 : i32
    return %arg0, %c0_i32 : i32, i32
  }
  func.func @transform_4(%arg0: i32) -> (i32, i32) {
    %c0_i32 = arith.constant 0 : i32
    %c0_i32_0 = arith.constant 0 : i32
    return %arg0, %c0_i32 : i32, i32
  }
  func.func @transform_5(%arg0: i32) -> (i32, i32) {
    %c0_i32 = arith.constant 0 : i32
    %c0_i32_0 = arith.constant 0 : i32
    %c0_i32_1 = arith.constant 0 : i32
    return %c0_i32, %c0_i32_0 : i32, i32
  }
  func.func @transform_6(%arg0: i32) -> (i32, i32) {
    %c0_i32 = arith.constant 0 : i32
    %c0_i32_0 = arith.constant 0 : i32
    %c0_i32_1 = arith.constant 0 : i32
    return %c0_i32, %c0_i32_0 : i32, i32
  }
  func.func @transform_7(%arg0: i32) -> (i32, i32) {
    %c0_i32 = arith.constant 0 : i32
    %c0_i32_0 = arith.constant 0 : i32
    %c0_i32_1 = arith.constant 0 : i32
    return %c0_i32, %c0_i32_0 : i32, i32
  }
  func.func @transform_8(%arg0: i32) -> (i32, i32) {
    %c0_i32 = arith.constant 0 : i32
    %c0_i32_0 = arith.constant 0 : i32
    return %arg0, %c0_i32 : i32, i32
  }
}

module attributes {stable_mosaic.version = 11 : i64} {
  func.func @_svdpp_kernel(%arg0: i32, %arg1: memref<1x1xf32, #tpu.memory_space<smem>>, %arg2: memref<8x1xi32, #tpu.memory_space<vmem>>, %arg3: memref<8x1xi32, #tpu.memory_space<vmem>>, %arg4: memref<8x1xi32, #tpu.memory_space<vmem>>, %arg5: memref<8x8xi32, #tpu.memory_space<vmem>>, %arg6: memref<64x33xf32, #tpu.memory_space<vmem>>, %arg7: memref<128x33xf32, #tpu.memory_space<vmem>>, %arg8: memref<128x32xbf16, #tpu.memory_space<vmem>>, %arg9: memref<8x1xf32, #tpu.memory_space<vmem>>) attributes {dimension_semantics = [#tpu.dimension_semantics<parallel>], iteration_bounds = array<i64: 3>, scalar_prefetch = 0 : i64, scratch_operands = 0 : i64, tpu.core_type = #tpu.core_type<tc>, window_params = [{transform_indices = @transform_0, window_bounds = array<i64: 1, 1>}, {transform_indices = @transform_1, window_bounds = array<i64: 8, 1>}, {transform_indices = @transform_2, window_bounds = array<i64: 8, 1>}, {transform_indices = @transform_3, window_bounds = array<i64: 8, 1>}, {transform_indices = @transform_4, window_bounds = array<i64: 8, 8>}, {pipeline_mode = #tpu.pipeline_mode<synchronous>, transform_indices = @transform_5, window_bounds = array<i64: 64, 33>}, {pipeline_mode = #tpu.pipeline_mode<synchronous>, transform_indices = @transform_6, window_bounds = array<i64: 128, 33>}, {pipeline_mode = #tpu.pipeline_mode<synchronous>, transform_indices = @transform_7, window_bounds = array<i64: 128, 32>}, {transform_indices = @transform_8, window_bounds = array<i64: 8, 1>}]} {
    %c0 = arith.constant 0 : index
    %c0_0 = arith.constant 0 : index
    %0 = vector.load %arg2[%c0, %c0_0] : memref<8x1xi32, #tpu.memory_space<vmem>>, vector<8x1xi32>
    %c0_1 = arith.constant 0 : index
    %c0_2 = arith.constant 0 : index
    %1 = vector.load %arg3[%c0_1, %c0_2] : memref<8x1xi32, #tpu.memory_space<vmem>>, vector<8x1xi32>
    %c0_3 = arith.constant 0 : index
    %c0_4 = arith.constant 0 : index
    %2 = vector.load %arg4[%c0_3, %c0_4] : memref<8x1xi32, #tpu.memory_space<vmem>>, vector<8x1xi32>
    %c0_5 = arith.constant 0 : index
    %c0_6 = arith.constant 0 : index
    %3 = vector.load %arg5[%c0_5, %c0_6] : memref<8x8xi32, #tpu.memory_space<vmem>>, vector<8x8xi32>
    %4 = tpu.iota {dimensions = array<i32: 1>} : vector<8x64xi32>
    %5 = tpu.iota {dimensions = array<i32: 1>} : vector<8x128xi32>
    %6 = vector.broadcast %0 : vector<8x1xi32> to vector<8x64xi32>
    %7 = arith.cmpi eq, %4, %6 : vector<8x64xi32>
    %8 = arith.extui %7 : vector<8x64xi1> to vector<8x64xi32>
    %9 = arith.sitofp %8 : vector<8x64xi32> to vector<8x64xf32>
    %10 = vector.broadcast %1 : vector<8x1xi32> to vector<8x128xi32>
    %11 = arith.cmpi eq, %5, %10 : vector<8x128xi32>
    %12 = arith.extui %11 : vector<8x128xi1> to vector<8x128xi32>
    %13 = arith.sitofp %12 : vector<8x128xi32> to vector<8x128xf32>
    %c0_7 = arith.constant 0 : index
    %c0_8 = arith.constant 0 : index
    %14 = vector.load %arg6[%c0_7, %c0_8] : memref<64x33xf32, #tpu.memory_space<vmem>>, vector<64x33xf32>
    %cst = arith.constant dense<0.000000e+00> : vector<8x33xf32>
    %15 = tpu.matmul %9, %14, %cst {dimension_numbers = #tpu.dot_dimension_numbers<[1], [0], [0], [1], [0, 0, 1, 1], [], []>} : vector<8x64xf32>, vector<64x33xf32>, vector<8x33xf32> -> vector<8x33xf32>
    %c0_9 = arith.constant 0 : index
    %c0_10 = arith.constant 0 : index
    %16 = vector.load %arg7[%c0_9, %c0_10] : memref<128x33xf32, #tpu.memory_space<vmem>>, vector<128x33xf32>
    %cst_11 = arith.constant dense<0.000000e+00> : vector<8x33xf32>
    %17 = tpu.matmul %13, %16, %cst_11 {dimension_numbers = #tpu.dot_dimension_numbers<[1], [0], [0], [1], [0, 0, 1, 1], [], []>} : vector<8x128xf32>, vector<128x33xf32>, vector<8x33xf32> -> vector<8x33xf32>
    %18 = vector.extract_strided_slice %15 {offsets = [0, 0], sizes = [8, 32], strides = [1, 1]} : vector<8x33xf32> to vector<8x32xf32>
    %19 = vector.extract_strided_slice %15 {offsets = [0, 32], sizes = [8, 1], strides = [1, 1]} : vector<8x33xf32> to vector<8x1xf32>
    %20 = tpu.iota {dimensions = array<i32: 1>} : vector<8x8xi32>
    %cst_12 = arith.constant 0.000000e+00 : f32
    %21 = vector.broadcast %cst_12 : f32 to vector<8x128xf32>
    %c0_i32 = arith.constant 0 : i32
    %22 = vector.broadcast %c0_i32 : i32 to vector<8x8xi32>
    %23 = arith.cmpi eq, %20, %22 : vector<8x8xi32>
    %c0_i32_13 = arith.constant 0 : i32
    %24 = vector.broadcast %c0_i32_13 : i32 to vector<8x8xi32>
    %25 = arith.select %23, %3, %24 : vector<8x8xi1>, vector<8x8xi32>
    %cst_14 = arith.constant dense<0> : vector<8xi32>
    %26 = vector.multi_reduction <add>, %25, %cst_14 [1] : vector<8x8xi32> to vector<8xi32>
    %27 = vector.shape_cast %26 : vector<8xi32> to vector<8x1xi32>
    %28 = vector.broadcast %27 : vector<8x1xi32> to vector<8x128xi32>
    %29 = arith.cmpi eq, %5, %28 : vector<8x128xi32>
    %30 = vector.broadcast %c0_i32 : i32 to vector<8x1xi32>
    %31 = arith.cmpi sgt, %2, %30 : vector<8x1xi32>
    %32 = vector.broadcast %31 : vector<8x1xi1> to vector<8x128xi1>
    %33 = arith.andi %29, %32 : vector<8x128xi1>
    %34 = arith.extui %33 : vector<8x128xi1> to vector<8x128xi32>
    %35 = arith.sitofp %34 : vector<8x128xi32> to vector<8x128xf32>
    %36 = arith.addf %21, %35 : vector<8x128xf32>
    %c1_i32 = arith.constant 1 : i32
    %37 = vector.broadcast %c1_i32 : i32 to vector<8x8xi32>
    %38 = arith.cmpi eq, %20, %37 : vector<8x8xi32>
    %c0_i32_15 = arith.constant 0 : i32
    %39 = vector.broadcast %c0_i32_15 : i32 to vector<8x8xi32>
    %40 = arith.select %38, %3, %39 : vector<8x8xi1>, vector<8x8xi32>
    %cst_16 = arith.constant dense<0> : vector<8xi32>
    %41 = vector.multi_reduction <add>, %40, %cst_16 [1] : vector<8x8xi32> to vector<8xi32>
    %42 = vector.shape_cast %41 : vector<8xi32> to vector<8x1xi32>
    %43 = vector.broadcast %42 : vector<8x1xi32> to vector<8x128xi32>
    %44 = arith.cmpi eq, %5, %43 : vector<8x128xi32>
    %45 = vector.broadcast %c1_i32 : i32 to vector<8x1xi32>
    %46 = arith.cmpi sgt, %2, %45 : vector<8x1xi32>
    %47 = vector.broadcast %46 : vector<8x1xi1> to vector<8x128xi1>
    %48 = arith.andi %44, %47 : vector<8x128xi1>
    %49 = arith.extui %48 : vector<8x128xi1> to vector<8x128xi32>
    %50 = arith.sitofp %49 : vector<8x128xi32> to vector<8x128xf32>
    %51 = arith.addf %36, %50 : vector<8x128xf32>
    %c2_i32 = arith.constant 2 : i32
    %52 = vector.broadcast %c2_i32 : i32 to vector<8x8xi32>
    %53 = arith.cmpi eq, %20, %52 : vector<8x8xi32>
    %c0_i32_17 = arith.constant 0 : i32
    %54 = vector.broadcast %c0_i32_17 : i32 to vector<8x8xi32>
    %55 = arith.select %53, %3, %54 : vector<8x8xi1>, vector<8x8xi32>
    %cst_18 = arith.constant dense<0> : vector<8xi32>
    %56 = vector.multi_reduction <add>, %55, %cst_18 [1] : vector<8x8xi32> to vector<8xi32>
    %57 = vector.shape_cast %56 : vector<8xi32> to vector<8x1xi32>
    %58 = vector.broadcast %57 : vector<8x1xi32> to vector<8x128xi32>
    %59 = arith.cmpi eq, %5, %58 : vector<8x128xi32>
    %60 = vector.broadcast %c2_i32 : i32 to vector<8x1xi32>
    %61 = arith.cmpi sgt, %2, %60 : vector<8x1xi32>
    %62 = vector.broadcast %61 : vector<8x1xi1> to vector<8x128xi1>
    %63 = arith.andi %59, %62 : vector<8x128xi1>
    %64 = arith.extui %63 : vector<8x128xi1> to vector<8x128xi32>
    %65 = arith.sitofp %64 : vector<8x128xi32> to vector<8x128xf32>
    %66 = arith.addf %51, %65 : vector<8x128xf32>
    %c3_i32 = arith.constant 3 : i32
    %67 = vector.broadcast %c3_i32 : i32 to vector<8x8xi32>
    %68 = arith.cmpi eq, %20, %67 : vector<8x8xi32>
    %c0_i32_19 = arith.constant 0 : i32
    %69 = vector.broadcast %c0_i32_19 : i32 to vector<8x8xi32>
    %70 = arith.select %68, %3, %69 : vector<8x8xi1>, vector<8x8xi32>
    %cst_20 = arith.constant dense<0> : vector<8xi32>
    %71 = vector.multi_reduction <add>, %70, %cst_20 [1] : vector<8x8xi32> to vector<8xi32>
    %72 = vector.shape_cast %71 : vector<8xi32> to vector<8x1xi32>
    %73 = vector.broadcast %72 : vector<8x1xi32> to vector<8x128xi32>
    %74 = arith.cmpi eq, %5, %73 : vector<8x128xi32>
    %75 = vector.broadcast %c3_i32 : i32 to vector<8x1xi32>
    %76 = arith.cmpi sgt, %2, %75 : vector<8x1xi32>
    %77 = vector.broadcast %76 : vector<8x1xi1> to vector<8x128xi1>
    %78 = arith.andi %74, %77 : vector<8x128xi1>
    %79 = arith.extui %78 : vector<8x128xi1> to vector<8x128xi32>
    %80 = arith.sitofp %79 : vector<8x128xi32> to vector<8x128xf32>
    %81 = arith.addf %66, %80 : vector<8x128xf32>
    %c4_i32 = arith.constant 4 : i32
    %82 = vector.broadcast %c4_i32 : i32 to vector<8x8xi32>
    %83 = arith.cmpi eq, %20, %82 : vector<8x8xi32>
    %c0_i32_21 = arith.constant 0 : i32
    %84 = vector.broadcast %c0_i32_21 : i32 to vector<8x8xi32>
    %85 = arith.select %83, %3, %84 : vector<8x8xi1>, vector<8x8xi32>
    %cst_22 = arith.constant dense<0> : vector<8xi32>
    %86 = vector.multi_reduction <add>, %85, %cst_22 [1] : vector<8x8xi32> to vector<8xi32>
    %87 = vector.shape_cast %86 : vector<8xi32> to vector<8x1xi32>
    %88 = vector.broadcast %87 : vector<8x1xi32> to vector<8x128xi32>
    %89 = arith.cmpi eq, %5, %88 : vector<8x128xi32>
    %90 = vector.broadcast %c4_i32 : i32 to vector<8x1xi32>
    %91 = arith.cmpi sgt, %2, %90 : vector<8x1xi32>
    %92 = vector.broadcast %91 : vector<8x1xi1> to vector<8x128xi1>
    %93 = arith.andi %89, %92 : vector<8x128xi1>
    %94 = arith.extui %93 : vector<8x128xi1> to vector<8x128xi32>
    %95 = arith.sitofp %94 : vector<8x128xi32> to vector<8x128xf32>
    %96 = arith.addf %81, %95 : vector<8x128xf32>
    %c5_i32 = arith.constant 5 : i32
    %97 = vector.broadcast %c5_i32 : i32 to vector<8x8xi32>
    %98 = arith.cmpi eq, %20, %97 : vector<8x8xi32>
    %c0_i32_23 = arith.constant 0 : i32
    %99 = vector.broadcast %c0_i32_23 : i32 to vector<8x8xi32>
    %100 = arith.select %98, %3, %99 : vector<8x8xi1>, vector<8x8xi32>
    %cst_24 = arith.constant dense<0> : vector<8xi32>
    %101 = vector.multi_reduction <add>, %100, %cst_24 [1] : vector<8x8xi32> to vector<8xi32>
    %102 = vector.shape_cast %101 : vector<8xi32> to vector<8x1xi32>
    %103 = vector.broadcast %102 : vector<8x1xi32> to vector<8x128xi32>
    %104 = arith.cmpi eq, %5, %103 : vector<8x128xi32>
    %105 = vector.broadcast %c5_i32 : i32 to vector<8x1xi32>
    %106 = arith.cmpi sgt, %2, %105 : vector<8x1xi32>
    %107 = vector.broadcast %106 : vector<8x1xi1> to vector<8x128xi1>
    %108 = arith.andi %104, %107 : vector<8x128xi1>
    %109 = arith.extui %108 : vector<8x128xi1> to vector<8x128xi32>
    %110 = arith.sitofp %109 : vector<8x128xi32> to vector<8x128xf32>
    %111 = arith.addf %96, %110 : vector<8x128xf32>
    %c6_i32 = arith.constant 6 : i32
    %112 = vector.broadcast %c6_i32 : i32 to vector<8x8xi32>
    %113 = arith.cmpi eq, %20, %112 : vector<8x8xi32>
    %c0_i32_25 = arith.constant 0 : i32
    %114 = vector.broadcast %c0_i32_25 : i32 to vector<8x8xi32>
    %115 = arith.select %113, %3, %114 : vector<8x8xi1>, vector<8x8xi32>
    %cst_26 = arith.constant dense<0> : vector<8xi32>
    %116 = vector.multi_reduction <add>, %115, %cst_26 [1] : vector<8x8xi32> to vector<8xi32>
    %117 = vector.shape_cast %116 : vector<8xi32> to vector<8x1xi32>
    %118 = vector.broadcast %117 : vector<8x1xi32> to vector<8x128xi32>
    %119 = arith.cmpi eq, %5, %118 : vector<8x128xi32>
    %120 = vector.broadcast %c6_i32 : i32 to vector<8x1xi32>
    %121 = arith.cmpi sgt, %2, %120 : vector<8x1xi32>
    %122 = vector.broadcast %121 : vector<8x1xi1> to vector<8x128xi1>
    %123 = arith.andi %119, %122 : vector<8x128xi1>
    %124 = arith.extui %123 : vector<8x128xi1> to vector<8x128xi32>
    %125 = arith.sitofp %124 : vector<8x128xi32> to vector<8x128xf32>
    %126 = arith.addf %111, %125 : vector<8x128xf32>
    %c7_i32 = arith.constant 7 : i32
    %127 = vector.broadcast %c7_i32 : i32 to vector<8x8xi32>
    %128 = arith.cmpi eq, %20, %127 : vector<8x8xi32>
    %c0_i32_27 = arith.constant 0 : i32
    %129 = vector.broadcast %c0_i32_27 : i32 to vector<8x8xi32>
    %130 = arith.select %128, %3, %129 : vector<8x8xi1>, vector<8x8xi32>
    %cst_28 = arith.constant dense<0> : vector<8xi32>
    %131 = vector.multi_reduction <add>, %130, %cst_28 [1] : vector<8x8xi32> to vector<8xi32>
    %132 = vector.shape_cast %131 : vector<8xi32> to vector<8x1xi32>
    %133 = vector.broadcast %132 : vector<8x1xi32> to vector<8x128xi32>
    %134 = arith.cmpi eq, %5, %133 : vector<8x128xi32>
    %135 = vector.broadcast %c7_i32 : i32 to vector<8x1xi32>
    %136 = arith.cmpi sgt, %2, %135 : vector<8x1xi32>
    %137 = vector.broadcast %136 : vector<8x1xi1> to vector<8x128xi1>
    %138 = arith.andi %134, %137 : vector<8x128xi1>
    %139 = arith.extui %138 : vector<8x128xi1> to vector<8x128xi32>
    %140 = arith.sitofp %139 : vector<8x128xi32> to vector<8x128xf32>
    %141 = arith.addf %126, %140 : vector<8x128xf32>
    %c8_i32 = arith.constant 8 : i32
    %142 = arith.truncf %141 : vector<8x128xf32> to vector<8x128xbf16>
    %c0_29 = arith.constant 0 : index
    %c0_30 = arith.constant 0 : index
    %143 = vector.load %arg8[%c0_29, %c0_30] : memref<128x32xbf16, #tpu.memory_space<vmem>>, vector<128x32xbf16>
    %cst_31 = arith.constant dense<0.000000e+00> : vector<8x32xf32>
    %144 = tpu.matmul %142, %143, %cst_31 {dimension_numbers = #tpu.dot_dimension_numbers<[1], [0], [0], [1], [0, 0, 1, 1], [], []>} : vector<8x128xbf16>, vector<128x32xbf16>, vector<8x32xf32> -> vector<8x32xf32>
    %145 = arith.sitofp %2 : vector<8x1xi32> to vector<8x1xf32>
    %146 = math.sqrt %145 : vector<8x1xf32>
    %cst_32 = arith.constant 9.99999971E-10 : f32
    %147 = vector.broadcast %cst_32 : f32 to vector<8x1xf32>
    %148 = arith.addf %146, %147 : vector<8x1xf32>
    %cst_33 = arith.constant 1.000000e+00 : f32
    %149 = vector.broadcast %cst_33 : f32 to vector<8x1xf32>
    %150 = arith.divf %149, %148 : vector<8x1xf32>
    %151 = vector.broadcast %150 : vector<8x1xf32> to vector<8x32xf32>
    %152 = arith.mulf %144, %151 : vector<8x32xf32>
    %153 = arith.addf %18, %152 : vector<8x32xf32>
    %cst_34 = arith.constant 1.000000e+00 : f32
    %154 = vector.broadcast %cst_34 : f32 to vector<8x1xf32>
    %155 = tpu.concatenate %153, %154 in 1 : vector<8x32xf32>, vector<8x1xf32> -> vector<8x33xf32>
    %156 = arith.mulf %17, %155 : vector<8x33xf32>
    %cst_35 = arith.constant dense<0.000000e+00> : vector<8xf32>
    %157 = vector.multi_reduction <add>, %156, %cst_35 [1] : vector<8x33xf32> to vector<8xf32>
    %158 = vector.shape_cast %157 : vector<8xf32> to vector<8x1xf32>
    %c0_36 = arith.constant 0 : index
    %c0_37 = arith.constant 0 : index
    %159 = memref.load %arg1[%c0_36, %c0_37] : memref<1x1xf32, #tpu.memory_space<smem>>
    %160 = vector.broadcast %159 : f32 to vector<8x1xf32>
    %161 = arith.addf %160, %19 : vector<8x1xf32>
    %162 = arith.addf %161, %158 : vector<8x1xf32>
    %c0_38 = arith.constant 0 : index
    %c0_39 = arith.constant 0 : index
    %163 = vector.load %arg9[%c0_38, %c0_39] : memref<8x1xf32, #tpu.memory_space<vmem>>, vector<8x1xf32>
    tpu.vector_store %arg9[%c0_38, %c0_39], %162 {strides = array<i32>} : memref<8x1xf32, #tpu.memory_space<vmem>>, vector<8x1xf32>,
    return
  }
  func.func @transform_0(%arg0: i32) -> (i32, i32) {
    %c0_i32 = arith.constant 0 : i32
    %c0_i32_0 = arith.constant 0 : i32
    %c0_i32_1 = arith.constant 0 : i32
    return %c0_i32, %c0_i32_0 : i32, i32
  }
  func.func @transform_1(%arg0: i32) -> (i32, i32) {
    %c0_i32 = arith.constant 0 : i32
    %c0_i32_0 = arith.constant 0 : i32
    return %arg0, %c0_i32 : i32, i32
  }
  func.func @transform_2(%arg0: i32) -> (i32, i32) {
    %c0_i32 = arith.constant 0 : i32
    %c0_i32_0 = arith.constant 0 : i32
    return %arg0, %c0_i32 : i32, i32
  }
  func.func @transform_3(%arg0: i32) -> (i32, i32) {
    %c0_i32 = arith.constant 0 : i32
    %c0_i32_0 = arith.constant 0 : i32
    return %arg0, %c0_i32 : i32, i32
  }
  func.func @transform_4(%arg0: i32) -> (i32, i32) {
    %c0_i32 = arith.constant 0 : i32
    %c0_i32_0 = arith.constant 0 : i32
    return %arg0, %c0_i32 : i32, i32
  }
  func.func @transform_5(%arg0: i32) -> (i32, i32) {
    %c0_i32 = arith.constant 0 : i32
    %c0_i32_0 = arith.constant 0 : i32
    %c0_i32_1 = arith.constant 0 : i32
    return %c0_i32, %c0_i32_0 : i32, i32
  }
  func.func @transform_6(%arg0: i32) -> (i32, i32) {
    %c0_i32 = arith.constant 0 : i32
    %c0_i32_0 = arith.constant 0 : i32
    %c0_i32_1 = arith.constant 0 : i32
    return %c0_i32, %c0_i32_0 : i32, i32
  }
  func.func @transform_7(%arg0: i32) -> (i32, i32) {
    %c0_i32 = arith.constant 0 : i32
    %c0_i32_0 = arith.constant 0 : i32
    %c0_i32_1 = arith.constant 0 : i32
    return %c0_i32, %c0_i32_0 : i32, i32
  }
  func.func @transform_8(%arg0: i32) -> (i32, i32) {
    %c0_i32 = arith.constant 0 : i32
    %c0_i32_0 = arith.constant 0 : i32
    return %arg0, %c0_i32 : i32, i32
  }
}

</mosaic_0001>

<llo_original>
// kernel: tpu_custom_call.1
$region0: #{tpu_custom_call.1}
  #allocation0 [shape = 'u32[]', space=smem, size = 0x4, offset = 0x4, fixed_abs, tag = 'smem constant byte address 0x4 - core index']
  #allocation1 [shape = 'u32[72,128]{1,0:T(1,128)}', space=vmem, size = 0x9000, scoped, tag = 'internal scratch']
  #allocation2 [shape = 'f32[1,1]{1,0:T(1,128)S(6)}', space=smem, size = 0x200, scoped, tag = 'scoped memory for tpu_custom_call.1']
  %s0 = inlined_call_operand.<no memory space> [shape: f32[1,1], index: 0, kind: input, shape index: {}]
  %s1 = inlined_call_operand.vmem [shape: s32[24,1], index: 1, kind: input, shape index: {}]
  %s2 = inlined_call_operand.vmem [shape: s32[24,1], index: 2, kind: input, shape index: {}]
  %s3 = inlined_call_operand.vmem [shape: s32[24,1], index: 3, kind: input, shape index: {}]
  %s4 = inlined_call_operand.vmem [shape: s32[24,8], index: 4, kind: input, shape index: {}]
  %s5 = inlined_call_operand.vmem [shape: f32[64,33], index: 5, kind: input, shape index: {}]
  %s6 = inlined_call_operand.vmem [shape: f32[128,33], index: 6, kind: input, shape index: {}]
  %s7 = inlined_call_operand.vmem [shape: bf16[128,32], index: 7, kind: input, shape index: {}]
  %s8 = inlined_call_operand.vmem [shape: f32[24,1], index: 8, kind: output, shape index: {}]
  %s9 = sld [smem:[#allocation0]]
  $region65: #{tpu_custom_call.1} parent=0
    _
  %s11 = ssub.s32 1, %s9
  %s12 = scalar_select 0, %s11, %s9
  %13 = sst [smem:[#allocation2]] %s0
  loop: start=0, step=1, limit=5
  $region2: #{tpu_custom_call.1} parent=0 // loop_pre_header
    _
  $region3: #{tpu_custom_call.1} parent=0 // loop_header
    %s15 = sphi 0, %s19
    %p16 = scmp.ge.s32.totalorder %s15, 5
    %s23 = sphi 0, %s23
    %s25 = sphi 0, %s23
    %s26 = sphi 0, %s25
    %s40 = sphi 0, %s26
    %s46 = sphi 0, %s48
    %s49 = sphi 0, %s46
    %s50 = sphi 0, %s49
    %s66 = sphi 0, %s50
    %s72 = sphi 0, %s74
    %s75 = sphi 0, %s72
    %s76 = sphi 0, %s75
    %s92 = sphi 0, %s76
    %s98 = sphi 0, %s100
    %s101 = sphi 0, %s98
    %s102 = sphi 0, %s101
    %s118 = sphi 0, %s102
    %s124 = sphi 0, %s126
    %s127 = sphi 0, %s124
    %s128 = sphi 0, %s127
    %s144 = sphi 0, %s128
    %s148 = sphi 0, %s148
    %s150 = sphi 0, %s148
    %s151 = sphi 0, %s150
    %s165 = sphi 0, %s151
    %s169 = sphi 0, %s169
    %s171 = sphi 0, %s169
    %s172 = sphi 0, %s171
    %s186 = sphi 0, %s172
    %s190 = sphi 0, %s190
    %s192 = sphi 0, %s190
    %s193 = sphi 0, %s192
    %s207 = sphi 0, %s193
    %s213 = sphi 0, %s215
    %s216 = sphi 0, %s213
    %s217 = sphi 0, %s216
    %s233 = sphi 0, %s217
  $region4: #{tpu_custom_call.1} parent=0 // loop_header_branch
    %18 = sbr.rel (%p16) target = $region8
  $region5: #{tpu_custom_call.1} parent=0 // loop_body
    %s20 = ssub.s32 %s15, 1
    %s21 = ssub.s32 %s15, 2
    %s22 = sadd.s32 %s15, 1
    %s24 = sadd.s32 %s23, 1
    %p27 = scmp.eq.s32.totalorder %s15, 2
    %p28 = scmp.ne.s32.totalorder %s23, %s25
    %p29 = scmp.eq.s32.totalorder %s15, 0
    %p30 = por %p28, %p29
    %p31 = scmp.ne.s32.totalorder %s23, %s25
    %p32 = scmp.eq.s32.totalorder %s20, 2
    %p33 = por %p31, %p32
    %p34 = scmp.ne.s32.totalorder %s25, %s26
    %p35 = scmp.eq.s32.totalorder %s20, 0
    %p36 = por %p34, %p35
    %p37 = scmp.ne.s32.totalorder %s25, %s26
    %p38 = scmp.eq.s32.totalorder %s21, 2
    %p39 = por %p37, %p38
    %p41 = scmp.ne.s32.totalorder %s26, %s40
    %p42 = scmp.eq.s32.totalorder %s21, 0
    %p43 = por %p41, %p42
    %s44 = ssub.s32 %s15, %s22
    %p45 = scmp.eq.s32.totalorder %s44, 0
    %s47 = sadd.s32 %s46, 1
    %s48 = scalar_select %p45, %s46, %s47
    %p51 = pneg %p45
    %p52 = scmp.eq.s32.totalorder %s15, 2
    %p53 = por %p51, %p52
    %p54 = scmp.ne.s32.totalorder %s46, %s49
    %p55 = scmp.eq.s32.totalorder %s15, 0
    %p56 = por %p54, %p55
    %p57 = scmp.ne.s32.totalorder %s46, %s49
    %p58 = scmp.eq.s32.totalorder %s20, 2
    %p59 = por %p57, %p58
    %p60 = scmp.ne.s32.totalorder %s49, %s50
    %p61 = scmp.eq.s32.totalorder %s20, 0
    %p62 = por %p60, %p61
    %p63 = scmp.ne.s32.totalorder %s49, %s50
    %p64 = scmp.eq.s32.totalorder %s21, 2
    %p65 = por %p63, %p64
    %p67 = scmp.ne.s32.totalorder %s50, %s66
    %p68 = scmp.eq.s32.totalorder %s21, 0
    %p69 = por %p67, %p68
    %s70 = ssub.s32 %s15, %s22
    %p71 = scmp.eq.s32.totalorder %s70, 0
    %s73 = sadd.s32 %s72, 1
    %s74 = scalar_select %p71, %s72, %s73
    %p77 = pneg %p71
    %p78 = scmp.eq.s32.totalorder %s15, 2
    %p79 = por %p77, %p78
    %p80 = scmp.ne.s32.totalorder %s72, %s75
    %p81 = scmp.eq.s32.totalorder %s15, 0
    %p82 = por %p80, %p81
    %p83 = scmp.ne.s32.totalorder %s72, %s75
    %p84 = scmp.eq.s32.totalorder %s20, 2
    %p85 = por %p83, %p84
    %p86 = scmp.ne.s32.totalorder %s75, %s76
    %p87 = scmp.eq.s32.totalorder %s20, 0
    %p88 = por %p86, %p87
    %p89 = scmp.ne.s32.totalorder %s75, %s76
    %p90 = scmp.eq.s32.totalorder %s21, 2
    %p91 = por %p89, %p90
    %p93 = scmp.ne.s32.totalorder %s76, %s92
    %p94 = scmp.eq.s32.totalorder %s21, 0
    %p95 = por %p93, %p94
    %s96 = ssub.s32 %s15, %s22
    %p97 = scmp.eq.s32.totalorder %s96, 0
    %s99 = sadd.s32 %s98, 1
    %s100 = scalar_select %p97, %s98, %s99
    %p103 = pneg %p97
    %p104 = scmp.eq.s32.totalorder %s15, 2
    %p105 = por %p103, %p104
    %p106 = scmp.ne.s32.totalorder %s98, %s101
    %p107 = scmp.eq.s32.totalorder %s15, 0
    %p108 = por %p106, %p107
    %p109 = scmp.ne.s32.totalorder %s98, %s101
    %p110 = scmp.eq.s32.totalorder %s20, 2
    %p111 = por %p109, %p110
    %p112 = scmp.ne.s32.totalorder %s101, %s102
    %p113 = scmp.eq.s32.totalorder %s20, 0
    %p114 = por %p112, %p113
    %p115 = scmp.ne.s32.totalorder %s101, %s102
    %p116 = scmp.eq.s32.totalorder %s21, 2
    %p117 = por %p115, %p116
    %p119 = scmp.ne.s32.totalorder %s102, %s118
    %p120 = scmp.eq.s32.totalorder %s21, 0
    %p121 = por %p119, %p120
    %s122 = ssub.s32 %s15, %s22
    %p123 = scmp.eq.s32.totalorder %s122, 0
    %s125 = sadd.s32 %s124, 1
    %s126 = scalar_select %p123, %s124, %s125
    %p129 = pneg %p123
    %p130 = scmp.eq.s32.totalorder %s15, 2
    %p131 = por %p129, %p130
    %p132 = scmp.ne.s32.totalorder %s124, %s127
    %p133 = scmp.eq.s32.totalorder %s15, 0
    %p134 = por %p132, %p133
    %p135 = scmp.ne.s32.totalorder %s124, %s127
    %p136 = scmp.eq.s32.totalorder %s20, 2
    %p137 = por %p135, %p136
    %p138 = scmp.ne.s32.totalorder %s127, %s128
    %p139 = scmp.eq.s32.totalorder %s20, 0
    %p140 = por %p138, %p139
    %p141 = scmp.ne.s32.totalorder %s127, %s128
    %p142 = scmp.eq.s32.totalorder %s21, 2
    %p143 = por %p141, %p142
    %p145 = scmp.ne.s32.totalorder %s128, %s144
    %p146 = scmp.eq.s32.totalorder %s21, 0
    %p147 = por %p145, %p146
    %s149 = sadd.s32 %s148, 1
    %p152 = scmp.eq.s32.totalorder %s15, 2
    %p153 = scmp.ne.s32.totalorder %s148, %s150
    %p154 = scmp.eq.s32.totalorder %s15, 0
    %p155 = por %p153, %p154
    %p156 = scmp.ne.s32.totalorder %s148, %s150
    %p157 = scmp.eq.s32.totalorder %s20, 2
    %p158 = por %p156, %p157
    %p159 = scmp.ne.s32.totalorder %s150, %s151
    %p160 = scmp.eq.s32.totalorder %s20, 0
    %p161 = por %p159, %p160
    %p162 = scmp.ne.s32.totalorder %s150, %s151
    %p163 = scmp.eq.s32.totalorder %s21, 2
    %p164 = por %p162, %p163
    %p166 = scmp.ne.s32.totalorder %s151, %s165
    %p167 = scmp.eq.s32.totalorder %s21, 0
    %p168 = por %p166, %p167
    %s170 = sadd.s32 %s169, 1
    %p173 = scmp.eq.s32.totalorder %s15, 2
    %p174 = scmp.ne.s32.totalorder %s169, %s171
    %p175 = scmp.eq.s32.totalorder %s15, 0
    %p176 = por %p174, %p175
    %p177 = scmp.ne.s32.totalorder %s169, %s171
    %p178 = scmp.eq.s32.totalorder %s20, 2
    %p179 = por %p177, %p178
    %p180 = scmp.ne.s32.totalorder %s171, %s172
    %p181 = scmp.eq.s32.totalorder %s20, 0
    %p182 = por %p180, %p181
    %p183 = scmp.ne.s32.totalorder %s171, %s172
    %p184 = scmp.eq.s32.totalorder %s21, 2
    %p185 = por %p183, %p184
    %p187 = scmp.ne.s32.totalorder %s172, %s186
    %p188 = scmp.eq.s32.totalorder %s21, 0
    %p189 = por %p187, %p188
    %s191 = sadd.s32 %s190, 1
    %p194 = scmp.eq.s32.totalorder %s15, 2
    %p195 = scmp.ne.s32.totalorder %s190, %s192
    %p196 = scmp.eq.s32.totalorder %s15, 0
    %p197 = por %p195, %p196
    %p198 = scmp.ne.s32.totalorder %s190, %s192
    %p199 = scmp.eq.s32.totalorder %s20, 2
    %p200 = por %p198, %p199
    %p201 = scmp.ne.s32.totalorder %s192, %s193
    %p202 = scmp.eq.s32.totalorder %s20, 0
    %p203 = por %p201, %p202
    %p204 = scmp.ne.s32.totalorder %s192, %s193
    %p205 = scmp.eq.s32.totalorder %s21, 2
    %p206 = por %p204, %p205
    %p208 = scmp.ne.s32.totalorder %s193, %s207
    %p209 = scmp.eq.s32.totalorder %s21, 0
    %p210 = por %p208, %p209
    %s211 = ssub.s32 %s15, %s22
    %p212 = scmp.eq.s32.totalorder %s211, 0
    %s214 = sadd.s32 %s213, 1
    %s215 = scalar_select %p212, %s213, %s214
    %p218 = pneg %p212
    %p219 = scmp.eq.s32.totalorder %s15, 2
    %p220 = por %p218, %p219
    %p221 = scmp.ne.s32.totalorder %s213, %s216
    %p222 = scmp.eq.s32.totalorder %s15, 0
    %p223 = por %p221, %p222
    %p224 = scmp.ne.s32.totalorder %s213, %s216
    %p225 = scmp.eq.s32.totalorder %s20, 2
    %p226 = por %p224, %p225
    %p227 = scmp.ne.s32.totalorder %s216, %s217
    %p228 = scmp.eq.s32.totalorder %s20, 0
    %p229 = por %p227, %p228
    %p230 = scmp.ne.s32.totalorder %s216, %s217
    %p231 = scmp.eq.s32.totalorder %s21, 2
    %p232 = por %p230, %p231
    %p234 = scmp.ne.s32.totalorder %s217, %s233
    %p235 = scmp.eq.s32.totalorder %s21, 0
    %p236 = por %p234, %p235
    %p237 = scmp.le.s32.totalorder 1, %s15
    %p238 = scmp.lt.s32.totalorder %s15, 4
    %p239 = pnand %p237, %p238
    %p240 = pneg %p239
    // Predicated region
    $region9: #{tpu_custom_call.1} parent=5 // pred_check
      _
    $region10: #{tpu_custom_call.1} parent=5 // pred_check_branch
      %242 = sbr.rel (%p239) target = $region12
    $region11: #{tpu_custom_call.1} parent=5 // pred_region
      %s243 = ssub.s32 %s15, 1
      // Predicated region
      $region13: #{tpu_custom_call.1} parent=11 // pred_check
        %p244 = pneg %p36
      $region14: #{tpu_custom_call.1} parent=11 // pred_check_branch
        %246 = sbr.rel (%p244) target = $region16
      $region15: #{tpu_custom_call.1} parent=11 // pred_region
        _
      $region16: #{tpu_custom_call.1} parent=11 // pred_fallthru
        _
      // Predicated region
      $region17: #{tpu_custom_call.1} parent=11 // pred_check
        %p247 = pneg %p161
      $region18: #{tpu_custom_call.1} parent=11 // pred_check_branch
        %249 = sbr.rel (%p247) target = $region20
      $region19: #{tpu_custom_call.1} parent=11 // pred_region
        _
      $region20: #{tpu_custom_call.1} parent=11 // pred_fallthru
        _
      // Predicated region
      $region21: #{tpu_custom_call.1} parent=11 // pred_check
        %p250 = pneg %p182
      $region22: #{tpu_custom_call.1} parent=11 // pred_check_branch
        %252 = sbr.rel (%p250) target = $region24
      $region23: #{tpu_custom_call.1} parent=11 // pred_region
        _
      $region24: #{tpu_custom_call.1} parent=11 // pred_fallthru
        _
      // Predicated region
      $region25: #{tpu_custom_call.1} parent=11 // pred_check
        %p253 = pneg %p203
      $region26: #{tpu_custom_call.1} parent=11 // pred_check_branch
        %255 = sbr.rel (%p253) target = $region28
      $region27: #{tpu_custom_call.1} parent=11 // pred_region
        _
      $region28: #{tpu_custom_call.1} parent=11 // pred_fallthru
        _
    $region12: #{tpu_custom_call.1} parent=5 // pred_fallthru
      _
    %p256 = scmp.lt.s32.totalorder %s15, 3
    // Predicated region
    $region29: #{tpu_custom_call.1} parent=5 // pred_check
      %p257 = pneg %p256
    $region30: #{tpu_custom_call.1} parent=5 // pred_check_branch
      %259 = sbr.rel (%p257) target = $region32
    $region31: #{tpu_custom_call.1} parent=5 // pred_region
      // Predicated region
      $region33: #{tpu_custom_call.1} parent=31 // pred_check
        %p260 = pneg %p56
      $region34: #{tpu_custom_call.1} parent=31 // pred_check_branch
        %262 = sbr.rel (%p260) target = $region36
      $region35: #{tpu_custom_call.1} parent=31 // pred_region
        %p263 = scmp.lt.s32.totalorder %s15, 2
        %s264 = scalar_select %p263, %s15, 2
        %s265 = smul.addr %s264, 8
        %s266 = scalar_lea.vmem %s1, %s265
      $region36: #{tpu_custom_call.1} parent=31 // pred_fallthru
        _
      // Predicated region
      $region37: #{tpu_custom_call.1} parent=31 // pred_check
        %p267 = pneg %p82
      $region38: #{tpu_custom_call.1} parent=31 // pred_check_branch
        %269 = sbr.rel (%p267) target = $region40
      $region39: #{tpu_custom_call.1} parent=31 // pred_region
        %p270 = scmp.lt.s32.totalorder %s15, 2
        %s271 = scalar_select %p270, %s15, 2
        %s272 = smul.addr %s271, 8
        %s273 = scalar_lea.vmem %s2, %s272
      $region40: #{tpu_custom_call.1} parent=31 // pred_fallthru
        _
      // Predicated region
      $region41: #{tpu_custom_call.1} parent=31 // pred_check
        %p274 = pneg %p108
      $region42: #{tpu_custom_call.1} parent=31 // pred_check_branch
        %276 = sbr.rel (%p274) target = $region44
      $region43: #{tpu_custom_call.1} parent=31 // pred_region
        %p277 = scmp.lt.s32.totalorder %s15, 2
        %s278 = scalar_select %p277, %s15, 2
        %s279 = smul.addr %s278, 8
        %s280 = scalar_lea.vmem %s3, %s279
      $region44: #{tpu_custom_call.1} parent=31 // pred_fallthru
        _
      // Predicated region
      $region45: #{tpu_custom_call.1} parent=31 // pred_check
        %p281 = pneg %p134
      $region46: #{tpu_custom_call.1} parent=31 // pred_check_branch
        %283 = sbr.rel (%p281) target = $region48
      $region47: #{tpu_custom_call.1} parent=31 // pred_region
        %p284 = scmp.lt.s32.totalorder %s15, 2
        %s285 = scalar_select %p284, %s15, 2
        %s286 = smul.addr %s285, 8
        %s287 = scalar_lea.vmem %s4, %s286
      $region48: #{tpu_custom_call.1} parent=31 // pred_fallthru
        _
    $region32: #{tpu_custom_call.1} parent=5 // pred_fallthru
      _
    %p288 = scmp.le.s32.totalorder 1, %s15
    %p289 = scmp.lt.s32.totalorder %s15, 4
    %p290 = pnand %p288, %p289
    %p291 = pneg %p290
    // Predicated region
    $region49: #{tpu_custom_call.1} parent=5 // pred_check
      _
    $region50: #{tpu_custom_call.1} parent=5 // pred_check_branch
      %293 = sbr.rel (%p290) target = $region52
    $region51: #{tpu_custom_call.1} parent=5 // pred_region
      %s294 = ssub.s32 %s15, 1
      %p295 = pneg %p36
      %p296 = pneg %p33
      %p297 = scmp.lt.s32.totalorder %s20, 2
      %s298 = scalar_select %p297, %s20, 2
      %s299 = smul.addr %s298, 8
      %s300 = scalar_lea.vmem %s1, %s299
      %p301 = pneg %p62
      %p302 = pneg %p59
      %p303 = scmp.lt.s32.totalorder %s20, 2
      %s304 = scalar_select %p303, %s20, 2
      %s305 = smul.addr %s304, 8
      %s306 = scalar_lea.vmem %s2, %s305
      %p307 = pneg %p88
      %p308 = pneg %p85
      %p309 = scmp.lt.s32.totalorder %s20, 2
      %s310 = scalar_select %p309, %s20, 2
      %s311 = smul.addr %s310, 8
      %s312 = scalar_lea.vmem %s3, %s311
      %p313 = pneg %p114
      %p314 = pneg %p111
      %p315 = scmp.lt.s32.totalorder %s20, 2
      %s316 = scalar_select %p315, %s20, 2
      %s317 = smul.addr %s316, 8
      %s318 = scalar_lea.vmem %s4, %s317
      %p319 = pneg %p140
      %p320 = pneg %p137
      %p321 = pneg %p161
      %p322 = pneg %p158
      %p323 = pneg %p182
      %p324 = pneg %p179
      %p325 = pneg %p203
      %p326 = pneg %p200
      %p327 = pneg %p229
      %p328 = pneg %p226
      %p329 = scmp.lt.s32.totalorder %s20, 2
      %s330 = scalar_select %p329, %s20, 2
      %s331 = smul.addr %s330, 8
      %s332 = scalar_lea.vmem %s8, %s331
      %p333 = scmp.lt.s32.totalorder %s20, 2
      %s334 = scalar_select %p333, %s20, 2
      %s335 = smul.addr %s334, 8
      %s336 = scalar_lea.vmem %s1, %s335
      %p337 = scmp.lt.s32.totalorder %s20, 2
      %s338 = scalar_select %p337, %s20, 2
      %s339 = smul.addr %s338, 8
      %s340 = scalar_lea.vmem %s2, %s339
      %p341 = scmp.lt.s32.totalorder %s20, 2
      %s342 = scalar_select %p341, %s20, 2
      %s343 = smul.addr %s342, 8
      %s344 = scalar_lea.vmem %s3, %s343
      %p345 = scmp.lt.s32.totalorder %s20, 2
      %s346 = scalar_select %p345, %s20, 2
      %s347 = smul.addr %s346, 8
      %s348 = scalar_lea.vmem %s4, %s347
      %p349 = scmp.lt.s32.totalorder %s20, 2
      %s350 = scalar_select %p349, %s20, 2
      %s351 = smul.addr %s350, 8
      %s352 = scalar_lea.vmem %s8, %s351
      %v353 = vld [vmem:[%s336] sm:$0xff]
      %v354 = vld [vmem:[%s340] sm:$0xff]
      %v355 = vld [vmem:[%s344] sm:$0xff]
      %v356 = vld [vmem:[%s348] sm:$0xff]
      %v357 = vlaneseq
      %v358 = vand.u32 %v357, 127
      %359 = vset.pattern.permute.xlu0 0
      %360 = vperm.xlu0 %359, %v353
      %v361 = vpop.permute.xlu0 %360
      %vm362 = vcmp.eq.s32.totalorder %v358, %v361
      %v363 = vsel %vm362, 1, 0
      %v364 = vcvt.s32.f32 %v363
      %365 = vset.pattern.permute.xlu0 0
      %366 = vperm.xlu0 %365, %v354
      %v367 = vpop.permute.xlu0 %366
      %vm368 = vcmp.eq.s32.totalorder %v358, %v367
      %v369 = vsel %vm368, 1, 0
      %v370 = vcvt.s32.f32 %v369
      %v371 = vld [vmem:[%s5] sm:$0xff]
      %v372 = vld [vmem:[%s5 + $0x8] sm:$0xff]
      %v373 = vld [vmem:[%s5 + $0x10] sm:$0xff]
      %v374 = vld [vmem:[%s5 + $0x18] sm:$0xff]
      %v375 = vld [vmem:[%s5 + $0x20] sm:$0xff]
      %v376 = vld [vmem:[%s5 + $0x28] sm:$0xff]
      %v377 = vld [vmem:[%s5 + $0x30] sm:$0xff]
      %v378 = vld [vmem:[%s5 + $0x38] sm:$0xff]
      %vm379 = vcmask 523264
      %v381 = vsel %vm379, %v364, 0
      %383 = vmatpush.msra.mxu0 0.0
      %384 = vmatpush.msra.mxu0 0.0
      %385 = vmatpush.msra.mxu0 0.0
      %386 = vmatpush.msra.mxu0 0.0
      %387 = vmatpush.msra.mxu0 0.0
      %388 = vmatpush.msra.mxu0 0.0
      %389 = vmatpush.msra.mxu0 0.0
      %390 = vmatpush.msra.mxu0 0.0
      %391 = vmatpush.msra.mxu0 %v378
      %392 = vmatpush.msra.mxu0 %v377
      %393 = vmatpush.msra.mxu0 %v376
      %394 = vmatpush.msra.mxu0 %v375
      %395 = vmatpush.msra.mxu0 %v374
      %396 = vmatpush.msra.mxu0 %v373
      %397 = vmatpush.msra.mxu0 %v372
      %398 = vmatpush.msra.mxu0 %v371
      %399 = vmatmul.f32.gmra.mxu0 %v381
      %v400 = vpop.f32.mrf.mxu0
      %v401 = vadd.f32 0.0, %v400
      %402 = vdwg.mxu0
      %v403 = vld [vmem:[%s6] sm:$0xff]
      %v404 = vld [vmem:[%s6 + $0x8] sm:$0xff]
      %v405 = vld [vmem:[%s6 + $0x10] sm:$0xff]
      %v406 = vld [vmem:[%s6 + $0x18] sm:$0xff]
      %v407 = vld [vmem:[%s6 + $0x20] sm:$0xff]
      %v408 = vld [vmem:[%s6 + $0x28] sm:$0xff]
      %v409 = vld [vmem:[%s6 + $0x30] sm:$0xff]
      %v410 = vld [vmem:[%s6 + $0x38] sm:$0xff]
      %v411 = vld [vmem:[%s6 + $0x40] sm:$0xff]
      %v412 = vld [vmem:[%s6 + $0x48] sm:$0xff]
      %v413 = vld [vmem:[%s6 + $0x50] sm:$0xff]
      %v414 = vld [vmem:[%s6 + $0x58] sm:$0xff]
      %v415 = vld [vmem:[%s6 + $0x60] sm:$0xff]
      %v416 = vld [vmem:[%s6 + $0x68] sm:$0xff]
      %v417 = vld [vmem:[%s6 + $0x70] sm:$0xff]
      %v418 = vld [vmem:[%s6 + $0x78] sm:$0xff]
      %419 = vmatpush.msra.mxu0 %v418
      %420 = vmatpush.msra.mxu0 %v417
      %421 = vmatpush.msra.mxu0 %v416
      %422 = vmatpush.msra.mxu0 %v415
      %423 = vmatpush.msra.mxu0 %v414
      %424 = vmatpush.msra.mxu0 %v413
      %425 = vmatpush.msra.mxu0 %v412
      %426 = vmatpush.msra.mxu0 %v411
      %427 = vmatpush.msra.mxu0 %v410
      %428 = vmatpush.msra.mxu0 %v409
      %429 = vmatpush.msra.mxu0 %v408
      %430 = vmatpush.msra.mxu0 %v407
      %431 = vmatpush.msra.mxu0 %v406
      %432 = vmatpush.msra.mxu0 %v405
      %433 = vmatpush.msra.mxu0 %v404
      %434 = vmatpush.msra.mxu0 %v403
      %435 = vmatmul.f32.gmra.mxu0 %v370
      %v436 = vpop.f32.mrf.mxu0
      %v437 = vadd.f32 0.0, %v436
      %438 = vdwg.mxu0
      %vm439 = vcmp.eq.s32.totalorder %v358, 0
      %v440 = vsel %vm439, %v356, 0
      %vm441 = vcmask 64512
      %v442 = vsel %vm441, %v440, 0
      %v443 = vand.u32 %v442, 65535
      %v444 = vshrl.u32 %v442, 16
      %v445 = vcvt.s32.f32 %v443
      %v446 = vcvt.s32.f32 %v444
      %447 = vadd.xlane.f32.xlu0 %v445
      %v448 = vpop.xlane.xlu0 %447
      %449 = vadd.xlane.f32.xlu0 %v446
      %v450 = vpop.xlane.xlu0 %449
      %v451 = vcvt.f32.s32 %v448
      %v452 = vcvt.f32.s32 %v450
      %v453 = vshll.u32 %v452, 16
      %v454 = vadd.s32 %v453, %v451
      %vm455 = vcmp.eq.s32.totalorder %v358, %v454
      %vm456 = vcmp.gt.s32.totalorder %v355, 0
      %v457 = vsel %vm456, 1, 0
      %458 = vset.pattern.permute.xlu0 0
      %459 = vperm.xlu0 %458, %v457
      %v460 = vpop.permute.xlu0 %459
      %vm461 = vcmp.eq.s32.totalorder %v460, 1
      %vm462 = vmand %vm455, %vm461
      %v463 = vsel %vm462, 1, 0
      %v464 = vcvt.s32.f32 %v463
      %v465 = vadd.f32 %v464, 0.0
      %vm466 = vcmp.eq.s32.totalorder %v358, 1
      %v467 = vsel %vm466, %v356, 0
      %v468 = vsel %vm441, %v467, 0
      %v469 = vand.u32 %v468, 65535
      %v470 = vshrl.u32 %v468, 16
      %v471 = vcvt.s32.f32 %v469
      %v472 = vcvt.s32.f32 %v470
      %473 = vadd.xlane.f32.xlu0 %v471
      %v474 = vpop.xlane.xlu0 %473
      %475 = vadd.xlane.f32.xlu0 %v472
      %v476 = vpop.xlane.xlu0 %475
      %v477 = vcvt.f32.s32 %v474
      %v478 = vcvt.f32.s32 %v476
      %v479 = vshll.u32 %v478, 16
      %v480 = vadd.s32 %v479, %v477
      %vm481 = vcmp.eq.s32.totalorder %v358, %v480
      %vm482 = vcmp.gt.s32.totalorder %v355, 1
      %v483 = vsel %vm482, 1, 0
      %484 = vset.pattern.permute.xlu0 0
      %485 = vperm.xlu0 %484, %v483
      %v486 = vpop.permute.xlu0 %485
      %vm487 = vcmp.eq.s32.totalorder %v486, 1
      %vm488 = vmand %vm481, %vm487
      %v489 = vsel %vm488, 1, 0
      %v490 = vcvt.s32.f32 %v489
      %v491 = vadd.f32 %v465, %v490
      %vm492 = vcmp.eq.s32.totalorder %v358, 2
      %v493 = vsel %vm492, %v356, 0
      %v494 = vsel %vm441, %v493, 0
      %v495 = vand.u32 %v494, 65535
      %v496 = vshrl.u32 %v494, 16
      %v497 = vcvt.s32.f32 %v495
      %v498 = vcvt.s32.f32 %v496
      %499 = vadd.xlane.f32.xlu0 %v497
      %v500 = vpop.xlane.xlu0 %499
      %501 = vadd.xlane.f32.xlu0 %v498
      %v502 = vpop.xlane.xlu0 %501
      %v503 = vcvt.f32.s32 %v500
      %v504 = vcvt.f32.s32 %v502
      %v505 = vshll.u32 %v504, 16
      %v506 = vadd.s32 %v505, %v503
      %vm507 = vcmp.eq.s32.totalorder %v358, %v506
      %vm508 = vcmp.gt.s32.totalorder %v355, 2
      %v509 = vsel %vm508, 1, 0
      %510 = vset.pattern.permute.xlu0 0
      %511 = vperm.xlu0 %510, %v509
      %v512 = vpop.permute.xlu0 %511
      %vm513 = vcmp.eq.s32.totalorder %v512, 1
      %vm514 = vmand %vm507, %vm513
      %v515 = vsel %vm514, 1, 0
      %v516 = vcvt.s32.f32 %v515
      %v517 = vadd.f32 %v491, %v516
      %vm518 = vcmp.eq.s32.totalorder %v358, 3
      %v519 = vsel %vm518, %v356, 0
      %v520 = vsel %vm441, %v519, 0
      %v521 = vand.u32 %v520, 65535
      %v522 = vshrl.u32 %v520, 16
      %v523 = vcvt.s32.f32 %v521
      %v524 = vcvt.s32.f32 %v522
      %525 = vadd.xlane.f32.xlu0 %v523
      %v526 = vpop.xlane.xlu0 %525
      %527 = vadd.xlane.f32.xlu0 %v524
      %v528 = vpop.xlane.xlu0 %527
      %v529 = vcvt.f32.s32 %v526
      %v530 = vcvt.f32.s32 %v528
      %v531 = vshll.u32 %v530, 16
      %v532 = vadd.s32 %v531, %v529
      %vm533 = vcmp.eq.s32.totalorder %v358, %v532
      %vm534 = vcmp.gt.s32.totalorder %v355, 3
      %v535 = vsel %vm534, 1, 0
      %536 = vset.pattern.permute.xlu0 0
      %537 = vperm.xlu0 %536, %v535
      %v538 = vpop.permute.xlu0 %537
      %vm539 = vcmp.eq.s32.totalorder %v538, 1
      %vm540 = vmand %vm533, %vm539
      %v541 = vsel %vm540, 1, 0
      %v542 = vcvt.s32.f32 %v541
      %v543 = vadd.f32 %v517, %v542
      %vm544 = vcmp.eq.s32.totalorder %v358, 4
      %v545 = vsel %vm544, %v356, 0
      %v546 = vsel %vm441, %v545, 0
      %v547 = vand.u32 %v546, 65535
      %v548 = vshrl.u32 %v546, 16
      %v549 = vcvt.s32.f32 %v547
      %v550 = vcvt.s32.f32 %v548
      %551 = vadd.xlane.f32.xlu0 %v549
      %v552 = vpop.xlane.xlu0 %551
      %553 = vadd.xlane.f32.xlu0 %v550
      %v554 = vpop.xlane.xlu0 %553
      %v555 = vcvt.f32.s32 %v552
      %v556 = vcvt.f32.s32 %v554
      %v557 = vshll.u32 %v556, 16
      %v558 = vadd.s32 %v557, %v555
      %vm559 = vcmp.eq.s32.totalorder %v358, %v558
      %vm560 = vcmp.gt.s32.totalorder %v355, 4
      %v561 = vsel %vm560, 1, 0
      %562 = vset.pattern.permute.xlu0 0
      %563 = vperm.xlu0 %562, %v561
      %v564 = vpop.permute.xlu0 %563
      %vm565 = vcmp.eq.s32.totalorder %v564, 1
      %vm566 = vmand %vm559, %vm565
      %v567 = vsel %vm566, 1, 0
      %v568 = vcvt.s32.f32 %v567
      %v569 = vadd.f32 %v543, %v568
      %vm570 = vcmp.eq.s32.totalorder %v358, 5
      %v571 = vsel %vm570, %v356, 0
      %v572 = vsel %vm441, %v571, 0
      %v573 = vand.u32 %v572, 65535
      %v574 = vshrl.u32 %v572, 16
      %v575 = vcvt.s32.f32 %v573
      %v576 = vcvt.s32.f32 %v574
      %577 = vadd.xlane.f32.xlu0 %v575
      %v578 = vpop.xlane.xlu0 %577
      %579 = vadd.xlane.f32.xlu0 %v576
      %v580 = vpop.xlane.xlu0 %579
      %v581 = vcvt.f32.s32 %v578
      %v582 = vcvt.f32.s32 %v580
      %v583 = vshll.u32 %v582, 16
      %v584 = vadd.s32 %v583, %v581
      %vm585 = vcmp.eq.s32.totalorder %v358, %v584
      %vm586 = vcmp.gt.s32.totalorder %v355, 5
      %v587 = vsel %vm586, 1, 0
      %588 = vset.pattern.permute.xlu0 0
      %589 = vperm.xlu0 %588, %v587
      %v590 = vpop.permute.xlu0 %589
      %vm591 = vcmp.eq.s32.totalorder %v590, 1
      %vm592 = vmand %vm585, %vm591
      %v593 = vsel %vm592, 1, 0
      %v594 = vcvt.s32.f32 %v593
      %v595 = vadd.f32 %v569, %v594
      %vm596 = vcmp.eq.s32.totalorder %v358, 6
      %v597 = vsel %vm596, %v356, 0
      %v598 = vsel %vm441, %v597, 0
      %v599 = vand.u32 %v598, 65535
      %v600 = vshrl.u32 %v598, 16
      %v601 = vcvt.s32.f32 %v599
      %v602 = vcvt.s32.f32 %v600
      %603 = vadd.xlane.f32.xlu0 %v601
      %v604 = vpop.xlane.xlu0 %603
      %605 = vadd.xlane.f32.xlu0 %v602
      %v606 = vpop.xlane.xlu0 %605
      %v607 = vcvt.f32.s32 %v604
      %v608 = vcvt.f32.s32 %v606
      %v609 = vshll.u32 %v608, 16
      %v610 = vadd.s32 %v609, %v607
      %vm611 = vcmp.eq.s32.totalorder %v358, %v610
      %vm612 = vcmp.gt.s32.totalorder %v355, 6
      %v613 = vsel %vm612, 1, 0
      %614 = vset.pattern.permute.xlu0 0
      %615 = vperm.xlu0 %614, %v613
      %v616 = vpop.permute.xlu0 %615
      %vm617 = vcmp.eq.s32.totalorder %v616, 1
      %vm618 = vmand %vm611, %vm617
      %v619 = vsel %vm618, 1, 0
      %v620 = vcvt.s32.f32 %v619
      %v621 = vadd.f32 %v595, %v620
      %vm622 = vcmp.eq.s32.totalorder %v358, 7
      %v623 = vsel %vm622, %v356, 0
      %v624 = vsel %vm441, %v623, 0
      %v625 = vand.u32 %v624, 65535
      %v626 = vshrl.u32 %v624, 16
      %v627 = vcvt.s32.f32 %v625
      %v628 = vcvt.s32.f32 %v626
      %629 = vadd.xlane.f32.xlu0 %v627
      %v630 = vpop.xlane.xlu0 %629
      %631 = vadd.xlane.f32.xlu0 %v628
      %v632 = vpop.xlane.xlu0 %631
      %v633 = vcvt.f32.s32 %v630
      %v634 = vcvt.f32.s32 %v632
      %v635 = vshll.u32 %v634, 16
      %v636 = vadd.s32 %v635, %v633
      %vm637 = vcmp.eq.s32.totalorder %v358, %v636
      %vm638 = vcmp.gt.s32.totalorder %v355, 7
      %v639 = vsel %vm638, 1, 0
      %640 = vset.pattern.permute.xlu0 0
      %641 = vperm.xlu0 %640, %v639
      %v642 = vpop.permute.xlu0 %641
      %vm643 = vcmp.eq.s32.totalorder %v642, 1
      %vm644 = vmand %vm637, %vm643
      %v645 = vsel %vm644, 1, 0
      %v646 = vcvt.s32.f32 %v645
      %v647 = vadd.f32 %v621, %v646
      %v648 = vpack.c.bf16 %v647, %v647
      %v649 = vld [vmem:[%s7] sm:$0xf]
      %v650 = vld [vmem:[%s7 + $0x4] sm:$0xf]
      %v651 = vld [vmem:[%s7 + $0x8] sm:$0xf]
      %v652 = vld [vmem:[%s7 + $0xc] sm:$0xf]
      %v653 = vld [vmem:[%s7 + $0x10] sm:$0xf]
      %v654 = vld [vmem:[%s7 + $0x14] sm:$0xf]
      %v655 = vld [vmem:[%s7 + $0x18] sm:$0xf]
      %v656 = vld [vmem:[%s7 + $0x1c] sm:$0xf]
      %v657 = vld [vmem:[%s7 + $0x20] sm:$0xf]
      %v658 = vld [vmem:[%s7 + $0x24] sm:$0xf]
      %v659 = vld [vmem:[%s7 + $0x28] sm:$0xf]
      %v660 = vld [vmem:[%s7 + $0x2c] sm:$0xf]
      %v661 = vld [vmem:[%s7 + $0x30] sm:$0xf]
      %v662 = vld [vmem:[%s7 + $0x34] sm:$0xf]
      %v663 = vld [vmem:[%s7 + $0x38] sm:$0xf]
      %v664 = vld [vmem:[%s7 + $0x3c] sm:$0xf]
      %v681 = vunpack.c.l.b16 %v649
      %v682 = vunpack.c.l.b16 %v650
      %v683 = vunpack.c.l.b16 %v651
      %v684 = vunpack.c.l.b16 %v652
      %v685 = vunpack.c.l.b16 %v653
      %v686 = vunpack.c.l.b16 %v654
      %v687 = vunpack.c.l.b16 %v655
      %v688 = vunpack.c.l.b16 %v656
      %v689 = vunpack.c.l.b16 %v657
      %v690 = vunpack.c.l.b16 %v658
      %v691 = vunpack.c.l.b16 %v659
      %v692 = vunpack.c.l.b16 %v660
      %v693 = vunpack.c.l.b16 %v661
      %v694 = vunpack.c.l.b16 %v662
      %v695 = vunpack.c.l.b16 %v663
      %v696 = vunpack.c.l.b16 %v664
      %v697 = vpack.c.b16 %v682, %v681
      %v698 = vpack.c.b16 %v684, %v683
      %v699 = vpack.c.b16 %v686, %v685
      %v700 = vpack.c.b16 %v688, %v687
      %v701 = vpack.c.b16 %v690, %v689
      %v702 = vpack.c.b16 %v692, %v691
      %v703 = vpack.c.b16 %v694, %v693
      %v704 = vpack.c.b16 %v696, %v695
      %713 = vmatpush.bf16.msra.mxu0 %v704
      %714 = vmatpush.bf16.msra.mxu0 %v703
      %715 = vmatpush.bf16.msra.mxu0 %v702
      %716 = vmatpush.bf16.msra.mxu0 %v701
      %717 = vmatpush.bf16.msra.mxu0 %v700
      %718 = vmatpush.bf16.msra.mxu0 %v699
      %719 = vmatpush.bf16.msra.mxu0 %v698
      %720 = vmatpush.bf16.msra.mxu0 %v697
      %721 = vmatmul.bf16.gmra.mxu0 %v648
      %v722 = vpop.f32.mrf.mxu0
      %v723 = vadd.f32 0.0, %v722
      %v724 = vpop.f32.mrf.mxu0
      %725 = vdwg.mxu0
      %v726 = vcvt.s32.f32 %v355
      %v727 = vrsqrt.pop %v726
      %v728 = vmul.f32 %v727, %v726
      %v729 = vmul.f32 %v728, %v727
      %v730 = vmul.f32 0.5, %v729
      %v731 = vsub.f32 1.5, %v730
      %v732 = vmul.f32 %v727, %v731
      %v733 = vmul.f32 %v726, %v732
      %vm734 = vcmp.eq.f32.partialorder %v726, inf
      %v735 = vsel %vm734, %v726, %v733
      %vm736 = vcmp.eq.f32.partialorder %v726, 0.0
      %v737 = vand.u32 %v726, 2147483648
      %v738 = vsel %vm736, %v737, %v735
      %v739 = vadd.f32 %v738, 1e-09
      %v740 = vrcp.pop %v739
      %v741 = vmul.f32 %v739, %v740
      %v742 = vsub.f32 1.0, %v741
      %v743 = vmul.f32 %v740, %v742
      %v744 = vadd.f32 %v740, %v743
      %vm745 = vweird.f32 %v739
      %vm746 = vweird.f32 %v740
      %vm747 = vmor %vm745, %vm746
      %v748 = vsel %vm747, %v740, %v744
      %v749 = vand.u32 2147483647, %v739
      %vm750 = vcmp.eq.f32.partialorder %v749, 8.507059e+37
      %v751 = vand.u32 %v739, 2147483648
      %v752 = vor.u32 1.1754944e-38, %v751
      %v753 = vsel %vm750, %v752, %v748
      %v754 = vmul.f32 1.0, %v753
      %756 = vset.pattern.permute.xlu0 0
      %757 = vperm.xlu0 %756, %v754
      %v758 = vpop.permute.xlu0 %757
      %v760 = vmul.f32 %v723, %v758
      %v761 = vadd.f32 %v401, %v760
      %vm762 = vcmask 261120
      %v763 = vsel %vm762, %v761, 1.0
      %v764 = vmul.f32 %v437, %v763
      %vm765 = vcmask 269312
      %v766 = vsel %vm765, %v764, 0.0
      %767 = vadd.xlane.f32.xlu0 %v766
      %v768 = vpop.xlane.xlu0 %767
      %s769 = sld [smem:[#allocation2]]
      %v770 = vstv %s769
      %v771 = vadd.f32 %v770, %v401
      %v772 = vadd.f32 %v771, %v768
      %774 = vrot.lane.b32.xlu0 %v772, 96
      %v775 = vpop.permute.xlu0 %774
      %vm777 = vcmask 7168
      %778 = vst.msk [vmem:[%s352] sm:$0xff] %vm777, %v775
      %p779 = scmp.lt.s32.totalorder %s20, 2
      %s780 = scalar_select %p779, %s20, 2
      %s781 = smul.addr %s780, 8
      %s782 = scalar_lea.vmem %s8, %s781
      // Predicated region
      $region53: #{tpu_custom_call.1} parent=51 // pred_check
        %p783 = pneg %p226
      $region54: #{tpu_custom_call.1} parent=51 // pred_check_branch
        %785 = sbr.rel (%p783) target = $region56
      $region55: #{tpu_custom_call.1} parent=51 // pred_region
        _
      $region56: #{tpu_custom_call.1} parent=51 // pred_fallthru
        _
    $region52: #{tpu_custom_call.1} parent=5 // pred_fallthru
      _
    %p786 = scmp.le.s32.totalorder 2, %s15
    // Predicated region
    $region57: #{tpu_custom_call.1} parent=5 // pred_check
      %p787 = pneg %p786
    $region58: #{tpu_custom_call.1} parent=5 // pred_check_branch
      %789 = sbr.rel (%p787) target = $region60
    $region59: #{tpu_custom_call.1} parent=5 // pred_region
      %s790 = ssub.s32 %s15, 2
      // Predicated region
      $region61: #{tpu_custom_call.1} parent=59 // pred_check
        %p791 = pneg %p232
      $region62: #{tpu_custom_call.1} parent=59 // pred_check_branch
        %793 = sbr.rel (%p791) target = $region64
      $region63: #{tpu_custom_call.1} parent=59 // pred_region
        %p794 = scmp.lt.s32.totalorder %s21, 2
        %s795 = scalar_select %p794, %s21, 2
        %s796 = smul.addr %s795, 8
        %s797 = scalar_lea.vmem %s8, %s796
      $region64: #{tpu_custom_call.1} parent=59 // pred_fallthru
        _
    $region60: #{tpu_custom_call.1} parent=5 // pred_fallthru
      _
  $region6: #{tpu_custom_call.1} parent=0 // loop_footer
    %s19 = sadd.s32 1, %s15
  $region7: #{tpu_custom_call.1} parent=0 // loop_footer_branch
    %14 = sbr.rel target = $region3
  $region8: #{tpu_custom_call.1} parent=0 // loop_exit
    _

// kernel: tpu_custom_call.1
$region0: #{tpu_custom_call.1}
  #allocation0 [shape = 'u32[]', space=smem, size = 0x4, offset = 0x4, fixed_abs, tag = 'smem constant byte address 0x4 - core index']
  #allocation1 [shape = 'u32[72,128]{1,0:T(1,128)}', space=vmem, size = 0x9000, scoped, tag = 'internal scratch']
  #allocation2 [shape = 'f32[1,1]{1,0:T(1,128)S(6)}', space=smem, size = 0x200, scoped, tag = 'scoped memory for tpu_custom_call.1']
  %s0 = inlined_call_operand.<no memory space> [shape: f32[1,1], index: 0, kind: input, shape index: {}]
  %s1 = inlined_call_operand.vmem [shape: s32[24,1], index: 1, kind: input, shape index: {}]
  %s2 = inlined_call_operand.vmem [shape: s32[24,1], index: 2, kind: input, shape index: {}]
  %s3 = inlined_call_operand.vmem [shape: s32[24,1], index: 3, kind: input, shape index: {}]
  %s4 = inlined_call_operand.vmem [shape: s32[24,8], index: 4, kind: input, shape index: {}]
  %s5 = inlined_call_operand.vmem [shape: f32[64,33], index: 5, kind: input, shape index: {}]
  %s6 = inlined_call_operand.vmem [shape: f32[128,33], index: 6, kind: input, shape index: {}]
  %s7 = inlined_call_operand.vmem [shape: bf16[128,32], index: 7, kind: input, shape index: {}]
  %s8 = inlined_call_operand.vmem [shape: f32[24,1], index: 8, kind: output, shape index: {}]
  %s9 = sld [smem:[#allocation0]]
  $region65: #{tpu_custom_call.1} parent=0
    _
  %s11 = ssub.s32 1, %s9
  %s12 = scalar_select 0, %s11, %s9
  %13 = sst [smem:[#allocation2]] %s0
  loop: start=0, step=1, limit=5
  $region2: #{tpu_custom_call.1} parent=0 // loop_pre_header
    _
  $region3: #{tpu_custom_call.1} parent=0 // loop_header
    %s15 = sphi 0, %s19
    %p16 = scmp.ge.s32.totalorder %s15, 5
    %s23 = sphi 0, %s23
    %s25 = sphi 0, %s23
    %s26 = sphi 0, %s25
    %s40 = sphi 0, %s26
    %s46 = sphi 0, %s48
    %s49 = sphi 0, %s46
    %s50 = sphi 0, %s49
    %s66 = sphi 0, %s50
    %s72 = sphi 0, %s74
    %s75 = sphi 0, %s72
    %s76 = sphi 0, %s75
    %s92 = sphi 0, %s76
    %s98 = sphi 0, %s100
    %s101 = sphi 0, %s98
    %s102 = sphi 0, %s101
    %s118 = sphi 0, %s102
    %s124 = sphi 0, %s126
    %s127 = sphi 0, %s124
    %s128 = sphi 0, %s127
    %s144 = sphi 0, %s128
    %s148 = sphi 0, %s148
    %s150 = sphi 0, %s148
    %s151 = sphi 0, %s150
    %s165 = sphi 0, %s151
    %s169 = sphi 0, %s169
    %s171 = sphi 0, %s169
    %s172 = sphi 0, %s171
    %s186 = sphi 0, %s172
    %s190 = sphi 0, %s190
    %s192 = sphi 0, %s190
    %s193 = sphi 0, %s192
    %s207 = sphi 0, %s193
    %s213 = sphi 0, %s215
    %s216 = sphi 0, %s213
    %s217 = sphi 0, %s216
    %s233 = sphi 0, %s217
  $region4: #{tpu_custom_call.1} parent=0 // loop_header_branch
    %18 = sbr.rel (%p16) target = $region8
  $region5: #{tpu_custom_call.1} parent=0 // loop_body
    %s20 = ssub.s32 %s15, 1
    %s21 = ssub.s32 %s15, 2
    %s22 = sadd.s32 %s15, 1
    %s24 = sadd.s32 %s23, 1
    %p27 = scmp.eq.s32.totalorder %s15, 2
    %p28 = scmp.ne.s32.totalorder %s23, %s25
    %p29 = scmp.eq.s32.totalorder %s15, 0
    %p30 = por %p28, %p29
    %p31 = scmp.ne.s32.totalorder %s23, %s25
    %p32 = scmp.eq.s32.totalorder %s20, 2
    %p33 = por %p31, %p32
    %p34 = scmp.ne.s32.totalorder %s25, %s26
    %p35 = scmp.eq.s32.totalorder %s20, 0
    %p36 = por %p34, %p35
    %p37 = scmp.ne.s32.totalorder %s25, %s26
    %p38 = scmp.eq.s32.totalorder %s21, 2
    %p39 = por %p37, %p38
    %p41 = scmp.ne.s32.totalorder %s26, %s40
    %p42 = scmp.eq.s32.totalorder %s21, 0
    %p43 = por %p41, %p42
    %s44 = ssub.s32 %s15, %s22
    %p45 = scmp.eq.s32.totalorder %s44, 0
    %s47 = sadd.s32 %s46, 1
    %s48 = scalar_select %p45, %s46, %s47
    %p51 = pneg %p45
    %p52 = scmp.eq.s32.totalorder %s15, 2
    %p53 = por %p51, %p52
    %p54 = scmp.ne.s32.totalorder %s46, %s49
    %p55 = scmp.eq.s32.totalorder %s15, 0
    %p56 = por %p54, %p55
    %p57 = scmp.ne.s32.totalorder %s46, %s49
    %p58 = scmp.eq.s32.totalorder %s20, 2
    %p59 = por %p57, %p58
    %p60 = scmp.ne.s32.totalorder %s49, %s50
    %p61 = scmp.eq.s32.totalorder %s20, 0
    %p62 = por %p60, %p61
    %p63 = scmp.ne.s32.totalorder %s49, %s50
    %p64 = scmp.eq.s32.totalorder %s21, 2
    %p65 = por %p63, %p64
    %p67 = scmp.ne.s32.totalorder %s50, %s66
    %p68 = scmp.eq.s32.totalorder %s21, 0
    %p69 = por %p67, %p68
    %s70 = ssub.s32 %s15, %s22
    %p71 = scmp.eq.s32.totalorder %s70, 0
    %s73 = sadd.s32 %s72, 1
    %s74 = scalar_select %p71, %s72, %s73
    %p77 = pneg %p71
    %p78 = scmp.eq.s32.totalorder %s15, 2
    %p79 = por %p77, %p78
    %p80 = scmp.ne.s32.totalorder %s72, %s75
    %p81 = scmp.eq.s32.totalorder %s15, 0
    %p82 = por %p80, %p81
    %p83 = scmp.ne.s32.totalorder %s72, %s75
    %p84 = scmp.eq.s32.totalorder %s20, 2
    %p85 = por %p83, %p84
    %p86 = scmp.ne.s32.totalorder %s75, %s76
    %p87 = scmp.eq.s32.totalorder %s20, 0
    %p88 = por %p86, %p87
    %p89 = scmp.ne.s32.totalorder %s75, %s76
    %p90 = scmp.eq.s32.totalorder %s21, 2
    %p91 = por %p89, %p90
    %p93 = scmp.ne.s32.totalorder %s76, %s92
    %p94 = scmp.eq.s32.totalorder %s21, 0
    %p95 = por %p93, %p94
    %s96 = ssub.s32 %s15, %s22
    %p97 = scmp.eq.s32.totalorder %s96, 0
    %s99 = sadd.s32 %s98, 1
    %s100 = scalar_select %p97, %s98, %s99
    %p103 = pneg %p97
    %p104 = scmp.eq.s32.totalorder %s15, 2
    %p105 = por %p103, %p104
    %p106 = scmp.ne.s32.totalorder %s98, %s101
    %p107 = scmp.eq.s32.totalorder %s15, 0
    %p108 = por %p106, %p107
    %p109 = scmp.ne.s32.totalorder %s98, %s101
    %p110 = scmp.eq.s32.totalorder %s20, 2
    %p111 = por %p109, %p110
    %p112 = scmp.ne.s32.totalorder %s101, %s102
    %p113 = scmp.eq.s32.totalorder %s20, 0
    %p114 = por %p112, %p113
    %p115 = scmp.ne.s32.totalorder %s101, %s102
    %p116 = scmp.eq.s32.totalorder %s21, 2
    %p117 = por %p115, %p116
    %p119 = scmp.ne.s32.totalorder %s102, %s118
    %p120 = scmp.eq.s32.totalorder %s21, 0
    %p121 = por %p119, %p120
    %s122 = ssub.s32 %s15, %s22
    %p123 = scmp.eq.s32.totalorder %s122, 0
    %s125 = sadd.s32 %s124, 1
    %s126 = scalar_select %p123, %s124, %s125
    %p129 = pneg %p123
    %p130 = scmp.eq.s32.totalorder %s15, 2
    %p131 = por %p129, %p130
    %p132 = scmp.ne.s32.totalorder %s124, %s127
    %p133 = scmp.eq.s32.totalorder %s15, 0
    %p134 = por %p132, %p133
    %p135 = scmp.ne.s32.totalorder %s124, %s127
    %p136 = scmp.eq.s32.totalorder %s20, 2
    %p137 = por %p135, %p136
    %p138 = scmp.ne.s32.totalorder %s127, %s128
    %p139 = scmp.eq.s32.totalorder %s20, 0
    %p140 = por %p138, %p139
    %p141 = scmp.ne.s32.totalorder %s127, %s128
    %p142 = scmp.eq.s32.totalorder %s21, 2
    %p143 = por %p141, %p142
    %p145 = scmp.ne.s32.totalorder %s128, %s144
    %p146 = scmp.eq.s32.totalorder %s21, 0
    %p147 = por %p145, %p146
    %s149 = sadd.s32 %s148, 1
    %p152 = scmp.eq.s32.totalorder %s15, 2
    %p153 = scmp.ne.s32.totalorder %s148, %s150
    %p154 = scmp.eq.s32.totalorder %s15, 0
    %p155 = por %p153, %p154
    %p156 = scmp.ne.s32.totalorder %s148, %s150
    %p157 = scmp.eq.s32.totalorder %s20, 2
    %p158 = por %p156, %p157
    %p159 = scmp.ne.s32.totalorder %s150, %s151
    %p160 = scmp.eq.s32.totalorder %s20, 0
    %p161 = por %p159, %p160
    %p162 = scmp.ne.s32.totalorder %s150, %s151
    %p163 = scmp.eq.s32.totalorder %s21, 2
    %p164 = por %p162, %p163
    %p166 = scmp.ne.s32.totalorder %s151, %s165
    %p167 = scmp.eq.s32.totalorder %s21, 0
    %p168 = por %p166, %p167
    %s170 = sadd.s32 %s169, 1
    %p173 = scmp.eq.s32.totalorder %s15, 2
    %p174 = scmp.ne.s32.totalorder %s169, %s171
    %p175 = scmp.eq.s32.totalorder %s15, 0
    %p176 = por %p174, %p175
    %p177 = scmp.ne.s32.totalorder %s169, %s171
    %p178 = scmp.eq.s32.totalorder %s20, 2
    %p179 = por %p177, %p178
    %p180 = scmp.ne.s32.totalorder %s171, %s172
    %p181 = scmp.eq.s32.totalorder %s20, 0
    %p182 = por %p180, %p181
    %p183 = scmp.ne.s32.totalorder %s171, %s172
    %p184 = scmp.eq.s32.totalorder %s21, 2
    %p185 = por %p183, %p184
    %p187 = scmp.ne.s32.totalorder %s172, %s186
    %p188 = scmp.eq.s32.totalorder %s21, 0
    %p189 = por %p187, %p188
    %s191 = sadd.s32 %s190, 1
    %p194 = scmp.eq.s32.totalorder %s15, 2
    %p195 = scmp.ne.s32.totalorder %s190, %s192
    %p196 = scmp.eq.s32.totalorder %s15, 0
    %p197 = por %p195, %p196
    %p198 = scmp.ne.s32.totalorder %s190, %s192
    %p199 = scmp.eq.s32.totalorder %s20, 2
    %p200 = por %p198, %p199
    %p201 = scmp.ne.s32.totalorder %s192, %s193
    %p202 = scmp.eq.s32.totalorder %s20, 0
    %p203 = por %p201, %p202
    %p204 = scmp.ne.s32.totalorder %s192, %s193
    %p205 = scmp.eq.s32.totalorder %s21, 2
    %p206 = por %p204, %p205
    %p208 = scmp.ne.s32.totalorder %s193, %s207
    %p209 = scmp.eq.s32.totalorder %s21, 0
    %p210 = por %p208, %p209
    %s211 = ssub.s32 %s15, %s22
    %p212 = scmp.eq.s32.totalorder %s211, 0
    %s214 = sadd.s32 %s213, 1
    %s215 = scalar_select %p212, %s213, %s214
    %p218 = pneg %p212
    %p219 = scmp.eq.s32.totalorder %s15, 2
    %p220 = por %p218, %p219
    %p221 = scmp.ne.s32.totalorder %s213, %s216
    %p222 = scmp.eq.s32.totalorder %s15, 0
    %p223 = por %p221, %p222
    %p224 = scmp.ne.s32.totalorder %s213, %s216
    %p225 = scmp.eq.s32.totalorder %s20, 2
    %p226 = por %p224, %p225
    %p227 = scmp.ne.s32.totalorder %s216, %s217
    %p228 = scmp.eq.s32.totalorder %s20, 0
    %p229 = por %p227, %p228
    %p230 = scmp.ne.s32.totalorder %s216, %s217
    %p231 = scmp.eq.s32.totalorder %s21, 2
    %p232 = por %p230, %p231
    %p234 = scmp.ne.s32.totalorder %s217, %s233
    %p235 = scmp.eq.s32.totalorder %s21, 0
    %p236 = por %p234, %p235
    %p237 = scmp.le.s32.totalorder 1, %s15
    %p238 = scmp.lt.s32.totalorder %s15, 4
    %p239 = pnand %p237, %p238
    %p240 = pneg %p239
    // Predicated region
    $region9: #{tpu_custom_call.1} parent=5 // pred_check
      _
    $region10: #{tpu_custom_call.1} parent=5 // pred_check_branch
      %242 = sbr.rel (%p239) target = $region12
    $region11: #{tpu_custom_call.1} parent=5 // pred_region
      %s243 = ssub.s32 %s15, 1
      // Predicated region
      $region13: #{tpu_custom_call.1} parent=11 // pred_check
        %p244 = pneg %p36
      $region14: #{tpu_custom_call.1} parent=11 // pred_check_branch
        %246 = sbr.rel (%p244) target = $region16
      $region15: #{tpu_custom_call.1} parent=11 // pred_region
        _
      $region16: #{tpu_custom_call.1} parent=11 // pred_fallthru
        _
      // Predicated region
      $region17: #{tpu_custom_call.1} parent=11 // pred_check
        %p247 = pneg %p161
      $region18: #{tpu_custom_call.1} parent=11 // pred_check_branch
        %249 = sbr.rel (%p247) target = $region20
      $region19: #{tpu_custom_call.1} parent=11 // pred_region
        _
      $region20: #{tpu_custom_call.1} parent=11 // pred_fallthru
        _
      // Predicated region
      $region21: #{tpu_custom_call.1} parent=11 // pred_check
        %p250 = pneg %p182
      $region22: #{tpu_custom_call.1} parent=11 // pred_check_branch
        %252 = sbr.rel (%p250) target = $region24
      $region23: #{tpu_custom_call.1} parent=11 // pred_region
        _
      $region24: #{tpu_custom_call.1} parent=11 // pred_fallthru
        _
      // Predicated region
      $region25: #{tpu_custom_call.1} parent=11 // pred_check
        %p253 = pneg %p203
      $region26: #{tpu_custom_call.1} parent=11 // pred_check_branch
        %255 = sbr.rel (%p253) target = $region28
      $region27: #{tpu_custom_call.1} parent=11 // pred_region
        _
      $region28: #{tpu_custom_call.1} parent=11 // pred_fallthru
        _
    $region12: #{tpu_custom_call.1} parent=5 // pred_fallthru
      _
    %p256 = scmp.lt.s32.totalorder %s15, 3
    // Predicated region
    $region29: #{tpu_custom_call.1} parent=5 // pred_check
      %p257 = pneg %p256
    $region30: #{tpu_custom_call.1} parent=5 // pred_check_branch
      %259 = sbr.rel (%p257) target = $region32
    $region31: #{tpu_custom_call.1} parent=5 // pred_region
      // Predicated region
      $region33: #{tpu_custom_call.1} parent=31 // pred_check
        %p260 = pneg %p56
      $region34: #{tpu_custom_call.1} parent=31 // pred_check_branch
        %262 = sbr.rel (%p260) target = $region36
      $region35: #{tpu_custom_call.1} parent=31 // pred_region
        %p263 = scmp.lt.s32.totalorder %s15, 2
        %s264 = scalar_select %p263, %s15, 2
        %s265 = smul.addr %s264, 8
        %s266 = scalar_lea.vmem %s1, %s265
      $region36: #{tpu_custom_call.1} parent=31 // pred_fallthru
        _
      // Predicated region
      $region37: #{tpu_custom_call.1} parent=31 // pred_check
        %p267 = pneg %p82
      $region38: #{tpu_custom_call.1} parent=31 // pred_check_branch
        %269 = sbr.rel (%p267) target = $region40
      $region39: #{tpu_custom_call.1} parent=31 // pred_region
        %p270 = scmp.lt.s32.totalorder %s15, 2
        %s271 = scalar_select %p270, %s15, 2
        %s272 = smul.addr %s271, 8
        %s273 = scalar_lea.vmem %s2, %s272
      $region40: #{tpu_custom_call.1} parent=31 // pred_fallthru
        _
      // Predicated region
      $region41: #{tpu_custom_call.1} parent=31 // pred_check
        %p274 = pneg %p108
      $region42: #{tpu_custom_call.1} parent=31 // pred_check_branch
        %276 = sbr.rel (%p274) target = $region44
      $region43: #{tpu_custom_call.1} parent=31 // pred_region
        %p277 = scmp.lt.s32.totalorder %s15, 2
        %s278 = scalar_select %p277, %s15, 2
        %s279 = smul.addr %s278, 8
        %s280 = scalar_lea.vmem %s3, %s279
      $region44: #{tpu_custom_call.1} parent=31 // pred_fallthru
        _
      // Predicated region
      $region45: #{tpu_custom_call.1} parent=31 // pred_check
        %p281 = pneg %p134
      $region46: #{tpu_custom_call.1} parent=31 // pred_check_branch
        %283 = sbr.rel (%p281) target = $region48
      $region47: #{tpu_custom_call.1} parent=31 // pred_region
        %p284 = scmp.lt.s32.totalorder %s15, 2
        %s285 = scalar_select %p284, %s15, 2
        %s286 = smul.addr %s285, 8
        %s287 = scalar_lea.vmem %s4, %s286
      $region48: #{tpu_custom_call.1} parent=31 // pred_fallthru
        _
    $region32: #{tpu_custom_call.1} parent=5 // pred_fallthru
      _
    %p288 = scmp.le.s32.totalorder 1, %s15
    %p289 = scmp.lt.s32.totalorder %s15, 4
    %p290 = pnand %p288, %p289
    %p291 = pneg %p290
    // Predicated region
    $region49: #{tpu_custom_call.1} parent=5 // pred_check
      _
    $region50: #{tpu_custom_call.1} parent=5 // pred_check_branch
      %293 = sbr.rel (%p290) target = $region52
    $region51: #{tpu_custom_call.1} parent=5 // pred_region
      %s294 = ssub.s32 %s15, 1
      %p295 = pneg %p36
      %p296 = pneg %p33
      %p297 = scmp.lt.s32.totalorder %s20, 2
      %s298 = scalar_select %p297, %s20, 2
      %s299 = smul.addr %s298, 8
      %s300 = scalar_lea.vmem %s1, %s299
      %p301 = pneg %p62
      %p302 = pneg %p59
      %p303 = scmp.lt.s32.totalorder %s20, 2
      %s304 = scalar_select %p303, %s20, 2
      %s305 = smul.addr %s304, 8
      %s306 = scalar_lea.vmem %s2, %s305
      %p307 = pneg %p88
      %p308 = pneg %p85
      %p309 = scmp.lt.s32.totalorder %s20, 2
      %s310 = scalar_select %p309, %s20, 2
      %s311 = smul.addr %s310, 8
      %s312 = scalar_lea.vmem %s3, %s311
      %p313 = pneg %p114
      %p314 = pneg %p111
      %p315 = scmp.lt.s32.totalorder %s20, 2
      %s316 = scalar_select %p315, %s20, 2
      %s317 = smul.addr %s316, 8
      %s318 = scalar_lea.vmem %s4, %s317
      %p319 = pneg %p140
      %p320 = pneg %p137
      %p321 = pneg %p161
      %p322 = pneg %p158
      %p323 = pneg %p182
      %p324 = pneg %p179
      %p325 = pneg %p203
      %p326 = pneg %p200
      %p327 = pneg %p229
      %p328 = pneg %p226
      %p329 = scmp.lt.s32.totalorder %s20, 2
      %s330 = scalar_select %p329, %s20, 2
      %s331 = smul.addr %s330, 8
      %s332 = scalar_lea.vmem %s8, %s331
      %p333 = scmp.lt.s32.totalorder %s20, 2
      %s334 = scalar_select %p333, %s20, 2
      %s335 = smul.addr %s334, 8
      %s336 = scalar_lea.vmem %s1, %s335
      %p337 = scmp.lt.s32.totalorder %s20, 2
      %s338 = scalar_select %p337, %s20, 2
      %s339 = smul.addr %s338, 8
      %s340 = scalar_lea.vmem %s2, %s339
      %p341 = scmp.lt.s32.totalorder %s20, 2
      %s342 = scalar_select %p341, %s20, 2
      %s343 = smul.addr %s342, 8
      %s344 = scalar_lea.vmem %s3, %s343
      %p345 = scmp.lt.s32.totalorder %s20, 2
      %s346 = scalar_select %p345, %s20, 2
      %s347 = smul.addr %s346, 8
      %s348 = scalar_lea.vmem %s4, %s347
      %p349 = scmp.lt.s32.totalorder %s20, 2
      %s350 = scalar_select %p349, %s20, 2
      %s351 = smul.addr %s350, 8
      %s352 = scalar_lea.vmem %s8, %s351
      %v353 = vld [vmem:[%s336] sm:$0xff]
      %v354 = vld [vmem:[%s340] sm:$0xff]
      %v355 = vld [vmem:[%s344] sm:$0xff]
      %v356 = vld [vmem:[%s348] sm:$0xff]
      %v357 = vlaneseq
      %v358 = vand.u32 %v357, 127
      %359 = vset.pattern.permute.xlu0 0
      %360 = vperm.xlu0 %359, %v353
      %v361 = vpop.permute.xlu0 %360
      %vm362 = vcmp.eq.s32.totalorder %v358, %v361
      %v363 = vsel %vm362, 1, 0
      %v364 = vcvt.s32.f32 %v363
      %365 = vset.pattern.permute.xlu0 0
      %366 = vperm.xlu0 %365, %v354
      %v367 = vpop.permute.xlu0 %366
      %vm368 = vcmp.eq.s32.totalorder %v358, %v367
      %v369 = vsel %vm368, 1, 0
      %v370 = vcvt.s32.f32 %v369
      %v371 = vld [vmem:[%s5] sm:$0xff]
      %v372 = vld [vmem:[%s5 + $0x8] sm:$0xff]
      %v373 = vld [vmem:[%s5 + $0x10] sm:$0xff]
      %v374 = vld [vmem:[%s5 + $0x18] sm:$0xff]
      %v375 = vld [vmem:[%s5 + $0x20] sm:$0xff]
      %v376 = vld [vmem:[%s5 + $0x28] sm:$0xff]
      %v377 = vld [vmem:[%s5 + $0x30] sm:$0xff]
      %v378 = vld [vmem:[%s5 + $0x38] sm:$0xff]
      %vm379 = vcmask 523264
      %v381 = vsel %vm379, %v364, 0
      %383 = vmatpush.msra.mxu0 0.0
      %384 = vmatpush.msra.mxu0 0.0
      %385 = vmatpush.msra.mxu0 0.0
      %386 = vmatpush.msra.mxu0 0.0
      %387 = vmatpush.msra.mxu0 0.0
      %388 = vmatpush.msra.mxu0 0.0
      %389 = vmatpush.msra.mxu0 0.0
      %390 = vmatpush.msra.mxu0 0.0
      %391 = vmatpush.msra.mxu0 %v378
      %392 = vmatpush.msra.mxu0 %v377
      %393 = vmatpush.msra.mxu0 %v376
      %394 = vmatpush.msra.mxu0 %v375
      %395 = vmatpush.msra.mxu0 %v374
      %396 = vmatpush.msra.mxu0 %v373
      %397 = vmatpush.msra.mxu0 %v372
      %398 = vmatpush.msra.mxu0 %v371
      %399 = vmatmul.f32.gmra.mxu0 %v381
      %v400 = vpop.f32.mrf.mxu0
      %v401 = vadd.f32 0.0, %v400
      %402 = vdwg.mxu0
      %v403 = vld [vmem:[%s6] sm:$0xff]
      %v404 = vld [vmem:[%s6 + $0x8] sm:$0xff]
      %v405 = vld [vmem:[%s6 + $0x10] sm:$0xff]
      %v406 = vld [vmem:[%s6 + $0x18] sm:$0xff]
      %v407 = vld [vmem:[%s6 + $0x20] sm:$0xff]
      %v408 = vld [vmem:[%s6 + $0x28] sm:$0xff]
      %v409 = vld [vmem:[%s6 + $0x30] sm:$0xff]
      %v410 = vld [vmem:[%s6 + $0x38] sm:$0xff]
      %v411 = vld [vmem:[%s6 + $0x40] sm:$0xff]
      %v412 = vld [vmem:[%s6 + $0x48] sm:$0xff]
      %v413 = vld [vmem:[%s6 + $0x50] sm:$0xff]
      %v414 = vld [vmem:[%s6 + $0x58] sm:$0xff]
      %v415 = vld [vmem:[%s6 + $0x60] sm:$0xff]
      %v416 = vld [vmem:[%s6 + $0x68] sm:$0xff]
      %v417 = vld [vmem:[%s6 + $0x70] sm:$0xff]
      %v418 = vld [vmem:[%s6 + $0x78] sm:$0xff]
      %419 = vmatpush.msra.mxu0 %v418
      %420 = vmatpush.msra.mxu0 %v417
      %421 = vmatpush.msra.mxu0 %v416
      %422 = vmatpush.msra.mxu0 %v415
      %423 = vmatpush.msra.mxu0 %v414
      %424 = vmatpush.msra.mxu0 %v413
      %425 = vmatpush.msra.mxu0 %v412
      %426 = vmatpush.msra.mxu0 %v411
      %427 = vmatpush.msra.mxu0 %v410
      %428 = vmatpush.msra.mxu0 %v409
      %429 = vmatpush.msra.mxu0 %v408
      %430 = vmatpush.msra.mxu0 %v407
      %431 = vmatpush.msra.mxu0 %v406
      %432 = vmatpush.msra.mxu0 %v405
      %433 = vmatpush.msra.mxu0 %v404
      %434 = vmatpush.msra.mxu0 %v403
      %435 = vmatmul.f32.gmra.mxu0 %v370
      %v436 = vpop.f32.mrf.mxu0
      %v437 = vadd.f32 0.0, %v436
      %438 = vdwg.mxu0
      %vm439 = vcmp.eq.s32.totalorder %v358, 0
      %v440 = vsel %vm439, %v356, 0
      %vm441 = vcmask 64512
      %v442 = vsel %vm441, %v440, 0
      %v443 = vand.u32 %v442, 65535
      %v444 = vshrl.u32 %v442, 16
      %v445 = vcvt.s32.f32 %v443
      %v446 = vcvt.s32.f32 %v444
      %447 = vadd.xlane.f32.xlu0 %v445
      %v448 = vpop.xlane.xlu0 %447
      %449 = vadd.xlane.f32.xlu0 %v446
      %v450 = vpop.xlane.xlu0 %449
      %v451 = vcvt.f32.s32 %v448
      %v452 = vcvt.f32.s32 %v450
      %v453 = vshll.u32 %v452, 16
      %v454 = vadd.s32 %v453, %v451
      %vm455 = vcmp.eq.s32.totalorder %v358, %v454
      %vm456 = vcmp.gt.s32.totalorder %v355, 0
      %v457 = vsel %vm456, 1, 0
      %458 = vset.pattern.permute.xlu0 0
      %459 = vperm.xlu0 %458, %v457
      %v460 = vpop.permute.xlu0 %459
      %vm461 = vcmp.eq.s32.totalorder %v460, 1
      %vm462 = vmand %vm455, %vm461
      %v463 = vsel %vm462, 1, 0
      %v464 = vcvt.s32.f32 %v463
      %v465 = vadd.f32 %v464, 0.0
      %vm466 = vcmp.eq.s32.totalorder %v358, 1
      %v467 = vsel %vm466, %v356, 0
      %v468 = vsel %vm441, %v467, 0
      %v469 = vand.u32 %v468, 65535
      %v470 = vshrl.u32 %v468, 16
      %v471 = vcvt.s32.f32 %v469
      %v472 = vcvt.s32.f32 %v470
      %473 = vadd.xlane.f32.xlu0 %v471
      %v474 = vpop.xlane.xlu0 %473
      %475 = vadd.xlane.f32.xlu0 %v472
      %v476 = vpop.xlane.xlu0 %475
      %v477 = vcvt.f32.s32 %v474
      %v478 = vcvt.f32.s32 %v476
      %v479 = vshll.u32 %v478, 16
      %v480 = vadd.s32 %v479, %v477
      %vm481 = vcmp.eq.s32.totalorder %v358, %v480
      %vm482 = vcmp.gt.s32.totalorder %v355, 1
      %v483 = vsel %vm482, 1, 0
      %484 = vset.pattern.permute.xlu0 0
      %485 = vperm.xlu0 %484, %v483
      %v486 = vpop.permute.xlu0 %485
      %vm487 = vcmp.eq.s32.totalorder %v486, 1
      %vm488 = vmand %vm481, %vm487
      %v489 = vsel %vm488, 1, 0
      %v490 = vcvt.s32.f32 %v489
      %v491 = vadd.f32 %v465, %v490
      %vm492 = vcmp.eq.s32.totalorder %v358, 2
      %v493 = vsel %vm492, %v356, 0
      %v494 = vsel %vm441, %v493, 0
      %v495 = vand.u32 %v494, 65535
      %v496 = vshrl.u32 %v494, 16
      %v497 = vcvt.s32.f32 %v495
      %v498 = vcvt.s32.f32 %v496
      %499 = vadd.xlane.f32.xlu0 %v497
      %v500 = vpop.xlane.xlu0 %499
      %501 = vadd.xlane.f32.xlu0 %v498
      %v502 = vpop.xlane.xlu0 %501
      %v503 = vcvt.f32.s32 %v500
      %v504 = vcvt.f32.s32 %v502
      %v505 = vshll.u32 %v504, 16
      %v506 = vadd.s32 %v505, %v503
      %vm507 = vcmp.eq.s32.totalorder %v358, %v506
      %vm508 = vcmp.gt.s32.totalorder %v355, 2
      %v509 = vsel %vm508, 1, 0
      %510 = vset.pattern.permute.xlu0 0
      %511 = vperm.xlu0 %510, %v509
      %v512 = vpop.permute.xlu0 %511
      %vm513 = vcmp.eq.s32.totalorder %v512, 1
      %vm514 = vmand %vm507, %vm513
      %v515 = vsel %vm514, 1, 0
      %v516 = vcvt.s32.f32 %v515
      %v517 = vadd.f32 %v491, %v516
      %vm518 = vcmp.eq.s32.totalorder %v358, 3
      %v519 = vsel %vm518, %v356, 0
      %v520 = vsel %vm441, %v519, 0
      %v521 = vand.u32 %v520, 65535
      %v522 = vshrl.u32 %v520, 16
      %v523 = vcvt.s32.f32 %v521
      %v524 = vcvt.s32.f32 %v522
      %525 = vadd.xlane.f32.xlu0 %v523
      %v526 = vpop.xlane.xlu0 %525
      %527 = vadd.xlane.f32.xlu0 %v524
      %v528 = vpop.xlane.xlu0 %527
      %v529 = vcvt.f32.s32 %v526
      %v530 = vcvt.f32.s32 %v528
      %v531 = vshll.u32 %v530, 16
      %v532 = vadd.s32 %v531, %v529
      %vm533 = vcmp.eq.s32.totalorder %v358, %v532
      %vm534 = vcmp.gt.s32.totalorder %v355, 3
      %v535 = vsel %vm534, 1, 0
      %536 = vset.pattern.permute.xlu0 0
      %537 = vperm.xlu0 %536, %v535
      %v538 = vpop.permute.xlu0 %537
      %vm539 = vcmp.eq.s32.totalorder %v538, 1
      %vm540 = vmand %vm533, %vm539
      %v541 = vsel %vm540, 1, 0
      %v542 = vcvt.s32.f32 %v541
      %v543 = vadd.f32 %v517, %v542
      %vm544 = vcmp.eq.s32.totalorder %v358, 4
      %v545 = vsel %vm544, %v356, 0
      %v546 = vsel %vm441, %v545, 0
      %v547 = vand.u32 %v546, 65535
      %v548 = vshrl.u32 %v546, 16
      %v549 = vcvt.s32.f32 %v547
      %v550 = vcvt.s32.f32 %v548
      %551 = vadd.xlane.f32.xlu0 %v549
      %v552 = vpop.xlane.xlu0 %551
      %553 = vadd.xlane.f32.xlu0 %v550
      %v554 = vpop.xlane.xlu0 %553
      %v555 = vcvt.f32.s32 %v552
      %v556 = vcvt.f32.s32 %v554
      %v557 = vshll.u32 %v556, 16
      %v558 = vadd.s32 %v557, %v555
      %vm559 = vcmp.eq.s32.totalorder %v358, %v558
      %vm560 = vcmp.gt.s32.totalorder %v355, 4
      %v561 = vsel %vm560, 1, 0
      %562 = vset.pattern.permute.xlu0 0
      %563 = vperm.xlu0 %562, %v561
      %v564 = vpop.permute.xlu0 %563
      %vm565 = vcmp.eq.s32.totalorder %v564, 1
      %vm566 = vmand %vm559, %vm565
      %v567 = vsel %vm566, 1, 0
      %v568 = vcvt.s32.f32 %v567
      %v569 = vadd.f32 %v543, %v568
      %vm570 = vcmp.eq.s32.totalorder %v358, 5
      %v571 = vsel %vm570, %v356, 0
      %v572 = vsel %vm441, %v571, 0
      %v573 = vand.u32 %v572, 65535
      %v574 = vshrl.u32 %v572, 16
      %v575 = vcvt.s32.f32 %v573
      %v576 = vcvt.s32.f32 %v574
      %577 = vadd.xlane.f32.xlu0 %v575
      %v578 = vpop.xlane.xlu0 %577
      %579 = vadd.xlane.f32.xlu0 %v576
      %v580 = vpop.xlane.xlu0 %579
      %v581 = vcvt.f32.s32 %v578
      %v582 = vcvt.f32.s32 %v580
      %v583 = vshll.u32 %v582, 16
      %v584 = vadd.s32 %v583, %v581
      %vm585 = vcmp.eq.s32.totalorder %v358, %v584
      %vm586 = vcmp.gt.s32.totalorder %v355, 5
      %v587 = vsel %vm586, 1, 0
      %588 = vset.pattern.permute.xlu0 0
      %589 = vperm.xlu0 %588, %v587
      %v590 = vpop.permute.xlu0 %589
      %vm591 = vcmp.eq.s32.totalorder %v590, 1
      %vm592 = vmand %vm585, %vm591
      %v593 = vsel %vm592, 1, 0
      %v594 = vcvt.s32.f32 %v593
      %v595 = vadd.f32 %v569, %v594
      %vm596 = vcmp.eq.s32.totalorder %v358, 6
      %v597 = vsel %vm596, %v356, 0
      %v598 = vsel %vm441, %v597, 0
      %v599 = vand.u32 %v598, 65535
      %v600 = vshrl.u32 %v598, 16
      %v601 = vcvt.s32.f32 %v599
      %v602 = vcvt.s32.f32 %v600
      %603 = vadd.xlane.f32.xlu0 %v601
      %v604 = vpop.xlane.xlu0 %603
      %605 = vadd.xlane.f32.xlu0 %v602
      %v606 = vpop.xlane.xlu0 %605
      %v607 = vcvt.f32.s32 %v604
      %v608 = vcvt.f32.s32 %v606
      %v609 = vshll.u32 %v608, 16
      %v610 = vadd.s32 %v609, %v607
      %vm611 = vcmp.eq.s32.totalorder %v358, %v610
      %vm612 = vcmp.gt.s32.totalorder %v355, 6
      %v613 = vsel %vm612, 1, 0
      %614 = vset.pattern.permute.xlu0 0
      %615 = vperm.xlu0 %614, %v613
      %v616 = vpop.permute.xlu0 %615
      %vm617 = vcmp.eq.s32.totalorder %v616, 1
      %vm618 = vmand %vm611, %vm617
      %v619 = vsel %vm618, 1, 0
      %v620 = vcvt.s32.f32 %v619
      %v621 = vadd.f32 %v595, %v620
      %vm622 = vcmp.eq.s32.totalorder %v358, 7
      %v623 = vsel %vm622, %v356, 0
      %v624 = vsel %vm441, %v623, 0
      %v625 = vand.u32 %v624, 65535
      %v626 = vshrl.u32 %v624, 16
      %v627 = vcvt.s32.f32 %v625
      %v628 = vcvt.s32.f32 %v626
      %629 = vadd.xlane.f32.xlu0 %v627
      %v630 = vpop.xlane.xlu0 %629
      %631 = vadd.xlane.f32.xlu0 %v628
      %v632 = vpop.xlane.xlu0 %631
      %v633 = vcvt.f32.s32 %v630
      %v634 = vcvt.f32.s32 %v632
      %v635 = vshll.u32 %v634, 16
      %v636 = vadd.s32 %v635, %v633
      %vm637 = vcmp.eq.s32.totalorder %v358, %v636
      %vm638 = vcmp.gt.s32.totalorder %v355, 7
      %v639 = vsel %vm638, 1, 0
      %640 = vset.pattern.permute.xlu0 0
      %641 = vperm.xlu0 %640, %v639
      %v642 = vpop.permute.xlu0 %641
      %vm643 = vcmp.eq.s32.totalorder %v642, 1
      %vm644 = vmand %vm637, %vm643
      %v645 = vsel %vm644, 1, 0
      %v646 = vcvt.s32.f32 %v645
      %v647 = vadd.f32 %v621, %v646
      %v648 = vpack.c.bf16 %v647, %v647
      %v649 = vld [vmem:[%s7] sm:$0xf]
      %v650 = vld [vmem:[%s7 + $0x4] sm:$0xf]
      %v651 = vld [vmem:[%s7 + $0x8] sm:$0xf]
      %v652 = vld [vmem:[%s7 + $0xc] sm:$0xf]
      %v653 = vld [vmem:[%s7 + $0x10] sm:$0xf]
      %v654 = vld [vmem:[%s7 + $0x14] sm:$0xf]
      %v655 = vld [vmem:[%s7 + $0x18] sm:$0xf]
      %v656 = vld [vmem:[%s7 + $0x1c] sm:$0xf]
      %v657 = vld [vmem:[%s7 + $0x20] sm:$0xf]
      %v658 = vld [vmem:[%s7 + $0x24] sm:$0xf]
      %v659 = vld [vmem:[%s7 + $0x28] sm:$0xf]
      %v660 = vld [vmem:[%s7 + $0x2c] sm:$0xf]
      %v661 = vld [vmem:[%s7 + $0x30] sm:$0xf]
      %v662 = vld [vmem:[%s7 + $0x34] sm:$0xf]
      %v663 = vld [vmem:[%s7 + $0x38] sm:$0xf]
      %v664 = vld [vmem:[%s7 + $0x3c] sm:$0xf]
      %v681 = vunpack.c.l.b16 %v649
      %v682 = vunpack.c.l.b16 %v650
      %v683 = vunpack.c.l.b16 %v651
      %v684 = vunpack.c.l.b16 %v652
      %v685 = vunpack.c.l.b16 %v653
      %v686 = vunpack.c.l.b16 %v654
      %v687 = vunpack.c.l.b16 %v655
      %v688 = vunpack.c.l.b16 %v656
      %v689 = vunpack.c.l.b16 %v657
      %v690 = vunpack.c.l.b16 %v658
      %v691 = vunpack.c.l.b16 %v659
      %v692 = vunpack.c.l.b16 %v660
      %v693 = vunpack.c.l.b16 %v661
      %v694 = vunpack.c.l.b16 %v662
      %v695 = vunpack.c.l.b16 %v663
      %v696 = vunpack.c.l.b16 %v664
      %v697 = vpack.c.b16 %v682, %v681
      %v698 = vpack.c.b16 %v684, %v683
      %v699 = vpack.c.b16 %v686, %v685
      %v700 = vpack.c.b16 %v688, %v687
      %v701 = vpack.c.b16 %v690, %v689
      %v702 = vpack.c.b16 %v692, %v691
      %v703 = vpack.c.b16 %v694, %v693
      %v704 = vpack.c.b16 %v696, %v695
      %713 = vmatpush.bf16.msra.mxu0 %v704
      %714 = vmatpush.bf16.msra.mxu0 %v703
      %715 = vmatpush.bf16.msra.mxu0 %v702
      %716 = vmatpush.bf16.msra.mxu0 %v701
      %717 = vmatpush.bf16.msra.mxu0 %v700
      %718 = vmatpush.bf16.msra.mxu0 %v699
      %719 = vmatpush.bf16.msra.mxu0 %v698
      %720 = vmatpush.bf16.msra.mxu0 %v697
      %721 = vmatmul.bf16.gmra.mxu0 %v648
      %v722 = vpop.f32.mrf.mxu0
      %v723 = vadd.f32 0.0, %v722
      %v724 = vpop.f32.mrf.mxu0
      %725 = vdwg.mxu0
      %v726 = vcvt.s32.f32 %v355
      %v727 = vrsqrt.pop %v726
      %v728 = vmul.f32 %v727, %v726
      %v729 = vmul.f32 %v728, %v727
      %v730 = vmul.f32 0.5, %v729
      %v731 = vsub.f32 1.5, %v730
      %v732 = vmul.f32 %v727, %v731
      %v733 = vmul.f32 %v726, %v732
      %vm734 = vcmp.eq.f32.partialorder %v726, inf
      %v735 = vsel %vm734, %v726, %v733
      %vm736 = vcmp.eq.f32.partialorder %v726, 0.0
      %v737 = vand.u32 %v726, 2147483648
      %v738 = vsel %vm736, %v737, %v735
      %v739 = vadd.f32 %v738, 1e-09
      %v740 = vrcp.pop %v739
      %v741 = vmul.f32 %v739, %v740
      %v742 = vsub.f32 1.0, %v741
      %v743 = vmul.f32 %v740, %v742
      %v744 = vadd.f32 %v740, %v743
      %vm745 = vweird.f32 %v739
      %vm746 = vweird.f32 %v740
      %vm747 = vmor %vm745, %vm746
      %v748 = vsel %vm747, %v740, %v744
      %v749 = vand.u32 2147483647, %v739
      %vm750 = vcmp.eq.f32.partialorder %v749, 8.507059e+37
      %v751 = vand.u32 %v739, 2147483648
      %v752 = vor.u32 1.1754944e-38, %v751
      %v753 = vsel %vm750, %v752, %v748
      %v754 = vmul.f32 1.0, %v753
      %756 = vset.pattern.permute.xlu0 0
      %757 = vperm.xlu0 %756, %v754
      %v758 = vpop.permute.xlu0 %757
      %v760 = vmul.f32 %v723, %v758
      %v761 = vadd.f32 %v401, %v760
      %vm762 = vcmask 261120
      %v763 = vsel %vm762, %v761, 1.0
      %v764 = vmul.f32 %v437, %v763
      %vm765 = vcmask 269312
      %v766 = vsel %vm765, %v764, 0.0
      %767 = vadd.xlane.f32.xlu0 %v766
      %v768 = vpop.xlane.xlu0 %767
      %s769 = sld [smem:[#allocation2]]
      %v770 = vstv %s769
      %v771 = vadd.f32 %v770, %v401
      %v772 = vadd.f32 %v771, %v768
      %774 = vrot.lane.b32.xlu0 %v772, 96
      %v775 = vpop.permute.xlu0 %774
      %vm777 = vcmask 7168
      %778 = vst.msk [vmem:[%s352] sm:$0xff] %vm777, %v775
      %p779 = scmp.lt.s32.totalorder %s20, 2
      %s780 = scalar_select %p779, %s20, 2
      %s781 = smul.addr %s780, 8
      %s782 = scalar_lea.vmem %s8, %s781
      // Predicated region
      $region53: #{tpu_custom_call.1} parent=51 // pred_check
        %p783 = pneg %p226
      $region54: #{tpu_custom_call.1} parent=51 // pred_check_branch
        %785 = sbr.rel (%p783) target = $region56
      $region55: #{tpu_custom_call.1} parent=51 // pred_region
        _
      $region56: #{tpu_custom_call.1} parent=51 // pred_fallthru
        _
    $region52: #{tpu_custom_call.1} parent=5 // pred_fallthru
      _
    %p786 = scmp.le.s32.totalorder 2, %s15
    // Predicated region
    $region57: #{tpu_custom_call.1} parent=5 // pred_check
      %p787 = pneg %p786
    $region58: #{tpu_custom_call.1} parent=5 // pred_check_branch
      %789 = sbr.rel (%p787) target = $region60
    $region59: #{tpu_custom_call.1} parent=5 // pred_region
      %s790 = ssub.s32 %s15, 2
      // Predicated region
      $region61: #{tpu_custom_call.1} parent=59 // pred_check
        %p791 = pneg %p232
      $region62: #{tpu_custom_call.1} parent=59 // pred_check_branch
        %793 = sbr.rel (%p791) target = $region64
      $region63: #{tpu_custom_call.1} parent=59 // pred_region
        %p794 = scmp.lt.s32.totalorder %s21, 2
        %s795 = scalar_select %p794, %s21, 2
        %s796 = smul.addr %s795, 8
        %s797 = scalar_lea.vmem %s8, %s796
      $region64: #{tpu_custom_call.1} parent=59 // pred_fallthru
        _
    $region60: #{tpu_custom_call.1} parent=5 // pred_fallthru
      _
  $region6: #{tpu_custom_call.1} parent=0 // loop_footer
    %s19 = sadd.s32 1, %s15
  $region7: #{tpu_custom_call.1} parent=0 // loop_footer_branch
    %14 = sbr.rel target = $region3
  $region8: #{tpu_custom_call.1} parent=0 // loop_exit
    _

</llo_original>
